<compile_context>
chip_gen: v5e
topology: v5e:2x2
jax: 0.10.0
libtpu: 0.0.40
codegen_flags: <defaults>
</compile_context>

<pallas_src>
import functools

import jax
import jax.numpy as jnp
from jax.experimental import pallas as pl
from jax.experimental.pallas import tpu as pltpu

_LN_EPS = 1e-12
_MAX_ROW_TILE = 1024
_MIB = 1024 * 1024


# ----------------------------- helpers -----------------------------

@functools.lru_cache(maxsize=None)
def _vmem_limit():
    """Generation-aware scoped-VMEM limit (bytes)."""
    try:
        cap = pltpu.get_tpu_info().vmem_capacity_bytes
    except Exception:
        return 48 * _MIB                       # conservative fallback
    if cap >= 96 * _MIB:                       # v5e / v6e: 128 MiB physical
        return 100 * _MIB
    return max(32 * _MIB, min(cap - 8 * _MIB, 56 * _MIB))   # v7x: 64 MiB/TC


def _cp(semantics=("parallel",)):
    return pltpu.CompilerParams(dimension_semantics=semantics,
                                vmem_limit_bytes=_vmem_limit())


def _const_spec(shape):
    """BlockSpec for an operand whose block index never changes (weights, biases).

    Single-buffered: no point double-buffering a block that is fetched once.
    """
    index_map = lambda *args: (0,) * len(shape)
    try:
        return pl.BlockSpec(shape, index_map, pipeline_mode=pl.Buffered(1))
    except TypeError:                           # older jax without pipeline_mode
        return pl.BlockSpec(shape, index_map)


def _row_tile(m):
    return m if m <= _MAX_ROW_TILE else _MAX_ROW_TILE


def _apply_act(y, act):
    if act == "gelu":
        # TODO(synk): HF BERT uses exact (erf) GELU; tanh approximation used here.
        return 0.5 * y * (1.0 + jnp.tanh(0.7978845608028654 * (y + 0.044715 * y * y * y)))
    if act == "tanh":
        return jnp.tanh(y)
    return y


# ----------------------------- Pallas kernels -----------------------------

def _linear_kernel(x_ref, w_ref, b_ref, o_ref, *, act):
    # bf16 x bf16 -> f32 accumulate on the MXU.
    y = jnp.dot(x_ref[...], w_ref[...], preferred_element_type=jnp.float32)
    y = _apply_act(y + b_ref[...], act)
    o_ref[...] = y.astype(o_ref.dtype)


def _linear_add_ln_kernel(x_ref, w_ref, b_ref, r_ref, g_ref, bb_ref, o_ref, *, act):
    # y = LayerNorm(residual + act(x @ w + b)), stats in f32, one pass.
    y = jnp.dot(x_ref[...], w_ref[...], preferred_element_type=jnp.float32)
    y = _apply_act(y + b_ref[...], act)
    h = y + r_ref[...].astype(jnp.float32)
    mu = jnp.mean(h, axis=-1, keepdims=True)
    var = jnp.mean(jnp.square(h - mu), axis=-1, keepdims=True)
    out = (h - mu) * jax.lax.rsqrt(var + _LN_EPS) * g_ref[...] + bb_ref[...]
    o_ref[...] = out.astype(o_ref.dtype)


def _embed_ln_kernel(word_ref, pt_ref, g_ref, b_ref, o_ref):
    # LayerNorm(word + (pos + type)) fused; avoids an f32 (M,H) HBM round trip.
    h = word_ref[...].astype(jnp.float32) + pt_ref[...].astype(jnp.float32)
    mu = jnp.mean(h, axis=-1, keepdims=True)
    var = jnp.mean(jnp.square(h - mu), axis=-1, keepdims=True)
    out = (h - mu) * jax.lax.rsqrt(var + _LN_EPS) * g_ref[...] + b_ref[...]
    o_ref[...] = out.astype(o_ref.dtype)


def _attention_kernel(q_ref, k_ref, v_ref, m_ref, o_ref):
    # One (batch, head) pair per grid step; q already carries the 1/sqrt(d) scale.
    q = q_ref[...]                                    # (S, d) bf16
    k = k_ref[...]                                    # (S, d) bf16
    v = v_ref[...]                                    # (S, d) bf16
    s = jax.lax.dot_general(q, k, (((1,), (1,)), ((), ())),
                            preferred_element_type=jnp.float32)
    s = s + m_ref[...]                                # (1, S) additive key mask
    s = s - jnp.max(s, axis=-1, keepdims=True)
    p = jnp.exp(s)
    inv = pl.reciprocal(jnp.sum(p, axis=-1, keepdims=True), approx=True)
    p = (p * inv).astype(v.dtype)
    o_ref[...] = jnp.dot(p, v, preferred_element_type=jnp.float32).astype(o_ref.dtype)


def _pool_cls_kernel(cls_ref, wp_ref, bp_ref, wc_ref, bc_ref, o_ref):
    # logits = (tanh(cls @ Wp + bp)) @ Wc + bc, dropout(p=0.3) is identity at inference.
    pooled = jnp.tanh(jnp.dot(cls_ref[...], wp_ref[...],
                              preferred_element_type=jnp.float32) + bp_ref[...])
    logits = jnp.dot(pooled.astype(wc_ref.dtype), wc_ref[...],
                     preferred_element_type=jnp.float32) + bc_ref[...]
    o_ref[...] = logits


# ----------------------------- kernel wrappers -----------------------------

def linear(x, w, b, *, act="none", residual=None, gamma=None, beta=None,
           out_dtype=jnp.bfloat16):
    """y = act(x @ w + b), optionally fused into y = LayerNorm(residual + y).

    x:[M,K] bf16, w:[K,N] bf16, b/gamma/beta:[N] f32, residual:[M,N].
    Row-tiled over M ("parallel"); weights/biases are single-buffered VMEM residents.
    """
    M, K = x.shape
    N = w.shape[1]
    tm = _row_tile(M)
    grid = (pl.cdiv(M, tm),)
    x_spec = pl.BlockSpec((tm, K), lambda i: (i, 0))
    w_spec = _const_spec((K, N))
    vec_spec = _const_spec((1, N))
    out_spec = pl.BlockSpec((tm, N), lambda i: (i, 0))

    if residual is None:
        return pl.pallas_call(
            functools.partial(_linear_kernel, act=act),
            out_shape=jax.ShapeDtypeStruct((M, N), out_dtype),
            grid=grid,
            in_specs=[x_spec, w_spec, vec_spec],
            out_specs=out_spec,
            compiler_params=_cp(("parallel",)),
        )(x, w, b.reshape(1, N))

    res_spec = pl.BlockSpec((tm, N), lambda i: (i, 0))
    return pl.pallas_call(
        functools.partial(_linear_add_ln_kernel, act=act),
        out_shape=jax.ShapeDtypeStruct((M, N), out_dtype),
        grid=grid,
        in_specs=[x_spec, w_spec, vec_spec, res_spec, vec_spec, vec_spec],
        out_specs=out_spec,
        compiler_params=_cp(("parallel",)),
    )(x, w, b.reshape(1, N), residual, gamma.reshape(1, N), beta.reshape(1, N))


def embed_layernorm(word, pos_type, gamma, beta, *, out_dtype=jnp.bfloat16):
    """LayerNorm(word + pos_type); word:[B,S,H], pos_type:[S,H]."""
    B, S, H = word.shape
    return pl.pallas_call(
        _embed_ln_kernel,
        out_shape=jax.ShapeDtypeStruct((B, S, H), out_dtype),
        grid=(B,),
        in_specs=[pl.BlockSpec((None, S, H), lambda b: (b, 0, 0)),
                  _const_spec((S, H)),
                  _const_spec((1, H)),
                  _const_spec((1, H))],
        out_specs=pl.BlockSpec((None, S, H), lambda b: (b, 0, 0)),
        compiler_params=_cp(("parallel",)),
    )(word, pos_type, gamma.reshape(1, H), beta.reshape(1, H))


def attention(q, k, v, add_mask):
    """q/k/v:[B,nH,S,d] bf16 (q pre-scaled), add_mask:[B,1,S] f32 -> [B,nH,S,d] bf16.

    Grid (B, nH), both parallel: one head per step, per-head tiles DMA'd lane-dense.
    """
    B, nH, S, d = q.shape
    # TODO(synk): for long sequences switch to a flash-style tiled kernel with online
    #             softmax; the (S,S) f32 scores fit up to roughly S~2k on v5e/v6e and
    #             about half that on v7x (64 MiB VMEM per TensorCore).
    qkv_spec = pl.BlockSpec((None, None, S, d), lambda b, h: (b, h, 0, 0))
    return pl.pallas_call(
        _attention_kernel,
        out_shape=jax.ShapeDtypeStruct((B, nH, S, d), jnp.bfloat16),
        grid=(B, nH),
        in_specs=[qkv_spec, qkv_spec, qkv_spec,
                  pl.BlockSpec((None, 1, S), lambda b, h: (b, 0, 0))],
        out_specs=pl.BlockSpec((None, None, S, d), lambda b, h: (b, h, 0, 0)),
        compiler_params=_cp(("parallel", "parallel")),
    )(q, k, v, add_mask)


def pooler_classifier(cls_tok, wp, bp, wc, bc):
    """Fused pooler + classifier: [B,H] -> [B, padded_num_classes] f32."""
    B, H = cls_tok.shape
    NCP = wc.shape[1]
    return pl.pallas_call(
        _pool_cls_kernel,
        out_shape=jax.ShapeDtypeStruct((B, NCP), jnp.float32),
        compiler_params=pltpu.CompilerParams(vmem_limit_bytes=_vmem_limit()),
    )(cls_tok, wp, bp.reshape(1, H), wc, bc.reshape(1, NCP))


# ------------------------------ model glue ---------------------------------

def init_params(key, cfg):
    H, I, NC = cfg["hidden"], cfg["intermediate"], cfg["num_classes"]
    NCP = ((NC + 127) // 128) * 128          # lane-pad classifier output dim
    scale = 1.0 / float(cfg["head_dim"]) ** 0.5
    keys = iter(jax.random.split(key, 8 + 4 * cfg["num_layers"]))

    def w(shape):
        return jax.random.normal(next(keys), shape, jnp.float32) * 0.02

    params = {
        "word_emb": w((cfg["vocab"], H)),
        "pos_emb": w((cfg["max_pos"], H)),
        "type_emb": w((2, H)),
        "emb_ln_g": jnp.ones((H,), jnp.float32),
        "emb_ln_b": jnp.zeros((H,), jnp.float32),
        "layers": [],
        "pool_w": w((H, H)).astype(jnp.bfloat16),
        "pool_b": jnp.zeros((H,), jnp.float32),
        # classifier weight lane-padded NC -> NCP (padded columns are zero)
        "cls_w": jnp.pad(w((H, NC)), ((0, 0), (0, NCP - NC))).astype(jnp.bfloat16),
        "cls_b": jnp.zeros((NCP,), jnp.float32),
    }
    for _ in range(cfg["num_layers"]):
        # fused QKV projection [H, 3H] with column order [Q(H), K(H), V(H)];
        # 1/sqrt(head_dim) folded into the Q columns (and Q bias) at init.
        wqkv = w((H, 3 * H)).at[:, :H].multiply(scale).astype(jnp.bfloat16)
        bqkv = jnp.zeros((3 * H,), jnp.float32).at[:H].multiply(scale)
        params["layers"].append({
            "wqkv": wqkv, "bqkv": bqkv,
            "wo": w((H, H)).astype(jnp.bfloat16), "bo": jnp.zeros((H,), jnp.float32),
            "ln1_g": jnp.ones((H,), jnp.float32), "ln1_b": jnp.zeros((H,), jnp.float32),
            "w1": w((H, I)).astype(jnp.bfloat16), "b1": jnp.zeros((I,), jnp.float32),
            "w2": w((I, H)).astype(jnp.bfloat16), "b2": jnp.zeros((H,), jnp.float32),
            "ln2_g": jnp.ones((H,), jnp.float32), "ln2_b": jnp.zeros((H,), jnp.float32),
        })
    return params


def emotion_classifier_forward(params, input_ids, attention_mask, *, cfg):
    B, S = input_ids.shape
    H, nH, d = cfg["hidden"], cfg["num_heads"], cfg["head_dim"]
    M = B * S

    # --- BERT embeddings: gather in XLA, (add + LayerNorm) fused in one kernel ---
    # TODO(synk): token_type_ids hard-coded to 0 (single-segment inputs).
    word = jnp.take(params["word_emb"], input_ids, axis=0)            # (B,S,H) f32
    pos_type = params["pos_emb"][:S] + params["type_emb"][0][None, :]  # (S,H) f32
    x = embed_layernorm(word, pos_type, params["emb_ln_g"], params["emb_ln_b"])
    x = x.reshape(M, H)                                                # (M,H) bf16

    # additive attention mask over keys: (B,1,S)
    add_mask = (1.0 - attention_mask.astype(jnp.float32))[:, None, :] * -10000.0

    # --- transformer layers ---
    for lp in params["layers"]:
        qkv = linear(x, lp["wqkv"], lp["bqkv"])                        # (M,3H) fused QKV
        # head split done once by XLA so each head's q/k/v is a lane-dense (S,d) block
        qkv = qkv.reshape(B, S, 3, nH, d).transpose(2, 0, 3, 1, 4)     # (3,B,nH,S,d)
        ctx = attention(qkv[0], qkv[1], qkv[2], add_mask)              # (B,nH,S,d)
        ctx = ctx.transpose(0, 2, 1, 3).reshape(M, H)                  # (M,H)
        # attention output projection fused with residual-add + LayerNorm
        x = linear(ctx, lp["wo"], lp["bo"],
                   residual=x, gamma=lp["ln1_g"], beta=lp["ln1_b"])
        h = linear(x, lp["w1"], lp["b1"], act="gelu")
        # FFN second matmul fused with residual-add + LayerNorm
        x = linear(h, lp["w2"], lp["b2"],
                   residual=x, gamma=lp["ln2_g"], beta=lp["ln2_b"])

    # --- pooler (tanh on CLS) + dropout(identity at inference) + classifier, one kernel ---
    cls = x.reshape(B, S, H)[:, 0, :]                                  # (B,H) bf16
    logits = pooler_classifier(cls, params["pool_w"], params["pool_b"],
                               params["cls_w"], params["cls_b"])       # (B, padded)
    return logits[:, :cfg["num_classes"]]                              # (B, num_classes)


if __name__ == "__main__":
    cfg = dict(vocab=100, hidden=32, num_heads=2, head_dim=16, intermediate=64,
               num_layers=2, max_pos=16, num_classes=6)

    key = jax.random.PRNGKey(0)
    pkey, ikey = jax.random.split(key)
    params = init_params(pkey, cfg)

    B, S = 2, 8
    input_ids = jax.random.randint(ikey, (B, S), 0, cfg["vocab"], dtype=jnp.int32)
    attention_mask = jnp.ones((B, S), dtype=jnp.int32).at[1, 6:].set(0)  # pad batch 1

    fwd = jax.jit(functools.partial(emotion_classifier_forward, cfg=cfg))
    logits = fwd(params, input_ids, attention_mask)
    jax.block_until_ready(logits)

    assert logits.shape == (B, cfg["num_classes"]), logits.shape
    assert logits.dtype == jnp.float32
    print("KERNEL_OK")
</pallas_src>

<mosaic_0001>
module attributes {stable_mosaic.version = 11 : i64} {
  func.func @_linear_kernel(%arg0: i32, %arg1: memref<16x32xbf16, #tpu.memory_space<vmem>>, %arg2: memref<32x96xbf16, #tpu.memory_space<vmem>>, %arg3: memref<1x96xf32, #tpu.memory_space<vmem>>, %arg4: memref<16x96xbf16, #tpu.memory_space<vmem>>) attributes {dimension_semantics = [#tpu.dimension_semantics<parallel>], iteration_bounds = array<i64: 1>, scalar_prefetch = 0 : i64, scratch_operands = 0 : i64, tpu.core_type = #tpu.core_type<tc>, window_params = [{transform_indices = @transform_0, window_bounds = array<i64: 16, 32>}, {pipeline_mode = #tpu.pipeline_mode<synchronous>, transform_indices = @transform_1, window_bounds = array<i64: 32, 96>}, {pipeline_mode = #tpu.pipeline_mode<synchronous>, transform_indices = @transform_2, window_bounds = array<i64: 1, 96>}, {transform_indices = @transform_3, window_bounds = array<i64: 16, 96>}]} {
    %c0 = arith.constant 0 : index
    %c0_0 = arith.constant 0 : index
    %0 = vector.load %arg1[%c0, %c0_0] : memref<16x32xbf16, #tpu.memory_space<vmem>>, vector<16x32xbf16>
    %c0_1 = arith.constant 0 : index
    %c0_2 = arith.constant 0 : index
    %1 = vector.load %arg2[%c0_1, %c0_2] : memref<32x96xbf16, #tpu.memory_space<vmem>>, vector<32x96xbf16>
    %cst = arith.constant dense<0.000000e+00> : vector<16x96xf32>
    %2 = tpu.matmul %0, %1, %cst {dimension_numbers = #tpu.dot_dimension_numbers<[1], [0], [0], [1], [0, 0, 1, 1], [], []>} : vector<16x32xbf16>, vector<32x96xbf16>, vector<16x96xf32> -> vector<16x96xf32>
    %c0_3 = arith.constant 0 : index
    %c0_4 = arith.constant 0 : index
    %3 = vector.load %arg3[%c0_3, %c0_4] : memref<1x96xf32, #tpu.memory_space<vmem>>, vector<1x96xf32>
    %4 = vector.broadcast %3 : vector<1x96xf32> to vector<16x96xf32>
    %5 = arith.addf %2, %4 : vector<16x96xf32>
    %6 = arith.truncf %5 : vector<16x96xf32> to vector<16x96xbf16>
    %c0_5 = arith.constant 0 : index
    %c0_6 = arith.constant 0 : index
    %7 = vector.load %arg4[%c0_5, %c0_6] : memref<16x96xbf16, #tpu.memory_space<vmem>>, vector<16x96xbf16>
    tpu.vector_store %arg4[%c0_5, %c0_6], %6 {strides = array<i32>} : memref<16x96xbf16, #tpu.memory_space<vmem>>, vector<16x96xbf16>,
    return
  }
  func.func @transform_0(%arg0: i32) -> (i32, i32) {
    %c0_i32 = arith.constant 0 : i32
    %c0_i32_0 = arith.constant 0 : i32
    return %arg0, %c0_i32 : i32, i32
  }
  func.func @transform_1(%arg0: i32) -> (i32, i32) {
    %c0_i32 = arith.constant 0 : i32
    %c0_i32_0 = arith.constant 0 : i32
    %c0_i32_1 = arith.constant 0 : i32
    return %c0_i32, %c0_i32_0 : i32, i32
  }
  func.func @transform_2(%arg0: i32) -> (i32, i32) {
    %c0_i32 = arith.constant 0 : i32
    %c0_i32_0 = arith.constant 0 : i32
    %c0_i32_1 = arith.constant 0 : i32
    return %c0_i32, %c0_i32_0 : i32, i32
  }
  func.func @transform_3(%arg0: i32) -> (i32, i32) {
    %c0_i32 = arith.constant 0 : i32
    %c0_i32_0 = arith.constant 0 : i32
    return %arg0, %c0_i32 : i32, i32
  }
}

module attributes {stable_mosaic.version = 11 : i64} {
  func.func @_embed_ln_kernel(%arg0: i32, %arg1: memref<1x8x32xf32, #tpu.memory_space<vmem>>, %arg2: memref<8x32xf32, #tpu.memory_space<vmem>>, %arg3: memref<1x32xf32, #tpu.memory_space<vmem>>, %arg4: memref<1x32xf32, #tpu.memory_space<vmem>>, %arg5: memref<1x8x32xbf16, #tpu.memory_space<vmem>>) attributes {dimension_semantics = [#tpu.dimension_semantics<parallel>], iteration_bounds = array<i64: 2>, scalar_prefetch = 0 : i64, scratch_operands = 0 : i64, tpu.core_type = #tpu.core_type<tc>, window_params = [{transform_indices = @transform_0, window_bounds = array<i64: 1, 8, 32>}, {pipeline_mode = #tpu.pipeline_mode<synchronous>, transform_indices = @transform_1, window_bounds = array<i64: 8, 32>}, {pipeline_mode = #tpu.pipeline_mode<synchronous>, transform_indices = @transform_2, window_bounds = array<i64: 1, 32>}, {pipeline_mode = #tpu.pipeline_mode<synchronous>, transform_indices = @transform_3, window_bounds = array<i64: 1, 32>}, {transform_indices = @transform_4, window_bounds = array<i64: 1, 8, 32>}]} {
    %c0 = arith.constant 0 : index
    %c0_0 = arith.constant 0 : index
    %c0_1 = arith.constant 0 : index
    %0 = vector.load %arg1[%c0, %c0_0, %c0_1] : memref<1x8x32xf32, #tpu.memory_space<vmem>>, vector<1x8x32xf32>
    %1 = vector.shape_cast %0 : vector<1x8x32xf32> to vector<8x32xf32>
    %c0_2 = arith.constant 0 : index
    %c0_3 = arith.constant 0 : index
    %2 = vector.load %arg2[%c0_2, %c0_3] : memref<8x32xf32, #tpu.memory_space<vmem>>, vector<8x32xf32>
    %3 = arith.addf %1, %2 : vector<8x32xf32>
    %cst = arith.constant dense<0.000000e+00> : vector<8xf32>
    %4 = vector.multi_reduction <add>, %3, %cst [1] : vector<8x32xf32> to vector<8xf32>
    %5 = vector.shape_cast %4 : vector<8xf32> to vector<8x1xf32>
    %cst_4 = arith.constant 3.200000e+01 : f32
    %6 = vector.broadcast %cst_4 : f32 to vector<8x1xf32>
    %7 = arith.divf %5, %6 : vector<8x1xf32>
    %8 = vector.broadcast %7 : vector<8x1xf32> to vector<8x32xf32>
    %9 = arith.subf %3, %8 : vector<8x32xf32>
    %10 = arith.mulf %9, %9 : vector<8x32xf32>
    %cst_5 = arith.constant dense<0.000000e+00> : vector<8xf32>
    %11 = vector.multi_reduction <add>, %10, %cst_5 [1] : vector<8x32xf32> to vector<8xf32>
    %12 = vector.shape_cast %11 : vector<8xf32> to vector<8x1xf32>
    %cst_6 = arith.constant 3.200000e+01 : f32
    %13 = vector.broadcast %cst_6 : f32 to vector<8x1xf32>
    %14 = arith.divf %12, %13 : vector<8x1xf32>
    %15 = vector.broadcast %7 : vector<8x1xf32> to vector<8x32xf32>
    %16 = arith.subf %3, %15 : vector<8x32xf32>
    %cst_7 = arith.constant 9.99999996E-13 : f32
    %17 = vector.broadcast %cst_7 : f32 to vector<8x1xf32>
    %18 = arith.addf %14, %17 : vector<8x1xf32>
    %19 = math.rsqrt %18 : vector<8x1xf32>
    %20 = vector.broadcast %19 : vector<8x1xf32> to vector<8x32xf32>
    %21 = arith.mulf %16, %20 : vector<8x32xf32>
    %c0_8 = arith.constant 0 : index
    %c0_9 = arith.constant 0 : index
    %22 = vector.load %arg3[%c0_8, %c0_9] : memref<1x32xf32, #tpu.memory_space<vmem>>, vector<1x32xf32>
    %23 = vector.broadcast %22 : vector<1x32xf32> to vector<8x32xf32>
    %24 = arith.mulf %21, %23 : vector<8x32xf32>
    %c0_10 = arith.constant 0 : index
    %c0_11 = arith.constant 0 : index
    %25 = vector.load %arg4[%c0_10, %c0_11] : memref<1x32xf32, #tpu.memory_space<vmem>>, vector<1x32xf32>
    %26 = vector.broadcast %25 : vector<1x32xf32> to vector<8x32xf32>
    %27 = arith.addf %24, %26 : vector<8x32xf32>
    %28 = arith.truncf %27 : vector<8x32xf32> to vector<8x32xbf16>
    %c0_12 = arith.constant 0 : index
    %c0_13 = arith.constant 0 : index
    %c0_14 = arith.constant 0 : index
    %29 = vector.load %arg5[%c0_12, %c0_13, %c0_14] : memref<1x8x32xbf16, #tpu.memory_space<vmem>>, vector<1x8x32xbf16>
    %30 = vector.shape_cast %29 : vector<1x8x32xbf16> to vector<8x32xbf16>
    %31 = vector.shape_cast %28 : vector<8x32xbf16> to vector<1x8x32xbf16>
    tpu.vector_store %arg5[%c0_12, %c0_13, %c0_14], %31 {strides = array<i32>} : memref<1x8x32xbf16, #tpu.memory_space<vmem>>, vector<1x8x32xbf16>,
    return
  }
  func.func @transform_0(%arg0: i32) -> (i32, i32, i32) {
    %c0_i32 = arith.constant 0 : i32
    %c0_i32_0 = arith.constant 0 : i32
    %c0_i32_1 = arith.constant 0 : i32
    return %arg0, %c0_i32, %c0_i32_0 : i32, i32, i32
  }
  func.func @transform_1(%arg0: i32) -> (i32, i32) {
    %c0_i32 = arith.constant 0 : i32
    %c0_i32_0 = arith.constant 0 : i32
    %c0_i32_1 = arith.constant 0 : i32
    return %c0_i32, %c0_i32_0 : i32, i32
  }
  func.func @transform_2(%arg0: i32) -> (i32, i32) {
    %c0_i32 = arith.constant 0 : i32
    %c0_i32_0 = arith.constant 0 : i32
    %c0_i32_1 = arith.constant 0 : i32
    return %c0_i32, %c0_i32_0 : i32, i32
  }
  func.func @transform_3(%arg0: i32) -> (i32, i32) {
    %c0_i32 = arith.constant 0 : i32
    %c0_i32_0 = arith.constant 0 : i32
    %c0_i32_1 = arith.constant 0 : i32
    return %c0_i32, %c0_i32_0 : i32, i32
  }
  func.func @transform_4(%arg0: i32) -> (i32, i32, i32) {
    %c0_i32 = arith.constant 0 : i32
    %c0_i32_0 = arith.constant 0 : i32
    %c0_i32_1 = arith.constant 0 : i32
    return %arg0, %c0_i32, %c0_i32_0 : i32, i32, i32
  }
}

module attributes {stable_mosaic.version = 11 : i64} {
  func.func @_attention_kernel(%arg0: i32, %arg1: i32, %arg2: memref<1x1x8x16xbf16, #tpu.memory_space<vmem>>, %arg3: memref<1x1x8x16xbf16, #tpu.memory_space<vmem>>, %arg4: memref<1x1x8x16xbf16, #tpu.memory_space<vmem>>, %arg5: memref<1x1x8xf32, #tpu.memory_space<vmem>>, %arg6: memref<1x1x8x16xbf16, #tpu.memory_space<vmem>>) attributes {dimension_semantics = [#tpu.dimension_semantics<parallel>, #tpu.dimension_semantics<parallel>], iteration_bounds = array<i64: 2, 2>, scalar_prefetch = 0 : i64, scratch_operands = 0 : i64, tpu.core_type = #tpu.core_type<tc>, window_params = [{transform_indices = @transform_0, window_bounds = array<i64: 1, 1, 8, 16>}, {transform_indices = @transform_1, window_bounds = array<i64: 1, 1, 8, 16>}, {transform_indices = @transform_2, window_bounds = array<i64: 1, 1, 8, 16>}, {transform_indices = @transform_3, window_bounds = array<i64: 1, 1, 8>}, {transform_indices = @transform_4, window_bounds = array<i64: 1, 1, 8, 16>}]} {
    %c0 = arith.constant 0 : index
    %c0_0 = arith.constant 0 : index
    %c0_1 = arith.constant 0 : index
    %c0_2 = arith.constant 0 : index
    %0 = vector.load %arg2[%c0, %c0_0, %c0_1, %c0_2] : memref<1x1x8x16xbf16, #tpu.memory_space<vmem>>, vector<1x1x8x16xbf16>
    %1 = vector.shape_cast %0 : vector<1x1x8x16xbf16> to vector<8x16xbf16>
    %c0_3 = arith.constant 0 : index
    %c0_4 = arith.constant 0 : index
    %c0_5 = arith.constant 0 : index
    %c0_6 = arith.constant 0 : index
    %2 = vector.load %arg3[%c0_3, %c0_4, %c0_5, %c0_6] : memref<1x1x8x16xbf16, #tpu.memory_space<vmem>>, vector<1x1x8x16xbf16>
    %3 = vector.shape_cast %2 : vector<1x1x8x16xbf16> to vector<8x16xbf16>
    %c0_7 = arith.constant 0 : index
    %c0_8 = arith.constant 0 : index
    %c0_9 = arith.constant 0 : index
    %c0_10 = arith.constant 0 : index
    %4 = vector.load %arg4[%c0_7, %c0_8, %c0_9, %c0_10] : memref<1x1x8x16xbf16, #tpu.memory_space<vmem>>, vector<1x1x8x16xbf16>
    %5 = vector.shape_cast %4 : vector<1x1x8x16xbf16> to vector<8x16xbf16>
    %cst = arith.constant dense<0.000000e+00> : vector<8x8xf32>
    %6 = tpu.matmul %1, %3, %cst {dimension_numbers = #tpu.dot_dimension_numbers<[1], [1], [0], [0], [0, 0, 1, 0], [], []>} : vector<8x16xbf16>, vector<8x16xbf16>, vector<8x8xf32> -> vector<8x8xf32>
    %c0_11 = arith.constant 0 : index
    %c0_12 = arith.constant 0 : index
    %c0_13 = arith.constant 0 : index
    %7 = vector.load %arg5[%c0_11, %c0_12, %c0_13] : memref<1x1x8xf32, #tpu.memory_space<vmem>>, vector<1x1x8xf32>
    %8 = vector.shape_cast %7 : vector<1x1x8xf32> to vector<1x8xf32>
    %9 = vector.broadcast %8 : vector<1x8xf32> to vector<8x8xf32>
    %10 = arith.addf %6, %9 : vector<8x8xf32>
    %cst_14 = arith.constant dense<0xFF800000> : vector<8xf32>
    %11 = vector.multi_reduction <maximumf>, %10, %cst_14 [1] : vector<8x8xf32> to vector<8xf32>
    %12 = vector.shape_cast %11 : vector<8xf32> to vector<8x1xf32>
    %13 = vector.broadcast %12 : vector<8x1xf32> to vector<8x8xf32>
    %14 = arith.subf %10, %13 : vector<8x8xf32>
    %15 = math.exp %14 : vector<8x8xf32>
    %cst_15 = arith.constant dense<0.000000e+00> : vector<8xf32>
    %16 = vector.multi_reduction <add>, %15, %cst_15 [1] : vector<8x8xf32> to vector<8xf32>
    %17 = vector.shape_cast %16 : vector<8xf32> to vector<8x1xf32>
    %18 = tpu.reciprocal %17 {approx = true} : vector<8x1xf32> -> vector<8x1xf32>
    %19 = vector.broadcast %18 : vector<8x1xf32> to vector<8x8xf32>
    %20 = arith.mulf %15, %19 : vector<8x8xf32>
    %21 = arith.truncf %20 : vector<8x8xf32> to vector<8x8xbf16>
    %cst_16 = arith.constant dense<0.000000e+00> : vector<8x16xf32>
    %22 = tpu.matmul %21, %5, %cst_16 {dimension_numbers = #tpu.dot_dimension_numbers<[1], [0], [0], [1], [0, 0, 1, 1], [], []>} : vector<8x8xbf16>, vector<8x16xbf16>, vector<8x16xf32> -> vector<8x16xf32>
    %23 = arith.truncf %22 : vector<8x16xf32> to vector<8x16xbf16>
    %c0_17 = arith.constant 0 : index
    %c0_18 = arith.constant 0 : index
    %c0_19 = arith.constant 0 : index
    %c0_20 = arith.constant 0 : index
    %24 = vector.load %arg6[%c0_17, %c0_18, %c0_19, %c0_20] : memref<1x1x8x16xbf16, #tpu.memory_space<vmem>>, vector<1x1x8x16xbf16>
    %25 = vector.shape_cast %24 : vector<1x1x8x16xbf16> to vector<8x16xbf16>
    %26 = vector.shape_cast %23 : vector<8x16xbf16> to vector<1x1x8x16xbf16>
    tpu.vector_store %arg6[%c0_17, %c0_18, %c0_19, %c0_20], %26 {strides = array<i32>} : memref<1x1x8x16xbf16, #tpu.memory_space<vmem>>, vector<1x1x8x16xbf16>,
    return
  }
  func.func @transform_0(%arg0: i32, %arg1: i32) -> (i32, i32, i32, i32) {
    %c0_i32 = arith.constant 0 : i32
    %c0_i32_0 = arith.constant 0 : i32
    %c0_i32_1 = arith.constant 0 : i32
    return %arg0, %arg1, %c0_i32, %c0_i32_0 : i32, i32, i32, i32
  }
  func.func @transform_1(%arg0: i32, %arg1: i32) -> (i32, i32, i32, i32) {
    %c0_i32 = arith.constant 0 : i32
    %c0_i32_0 = arith.constant 0 : i32
    %c0_i32_1 = arith.constant 0 : i32
    return %arg0, %arg1, %c0_i32, %c0_i32_0 : i32, i32, i32, i32
  }
  func.func @transform_2(%arg0: i32, %arg1: i32) -> (i32, i32, i32, i32) {
    %c0_i32 = arith.constant 0 : i32
    %c0_i32_0 = arith.constant 0 : i32
    %c0_i32_1 = arith.constant 0 : i32
    return %arg0, %arg1, %c0_i32, %c0_i32_0 : i32, i32, i32, i32
  }
  func.func @transform_3(%arg0: i32, %arg1: i32) -> (i32, i32, i32) {
    %c0_i32 = arith.constant 0 : i32
    %c0_i32_0 = arith.constant 0 : i32
    %c0_i32_1 = arith.constant 0 : i32
    return %arg0, %c0_i32, %c0_i32_0 : i32, i32, i32
  }
  func.func @transform_4(%arg0: i32, %arg1: i32) -> (i32, i32, i32, i32) {
    %c0_i32 = arith.constant 0 : i32
    %c0_i32_0 = arith.constant 0 : i32
    %c0_i32_1 = arith.constant 0 : i32
    return %arg0, %arg1, %c0_i32, %c0_i32_0 : i32, i32, i32, i32
  }
}

module attributes {stable_mosaic.version = 11 : i64} {
  func.func @_linear_add_ln_kernel(%arg0: i32, %arg1: memref<16x32xbf16, #tpu.memory_space<vmem>>, %arg2: memref<32x32xbf16, #tpu.memory_space<vmem>>, %arg3: memref<1x32xf32, #tpu.memory_space<vmem>>, %arg4: memref<16x32xbf16, #tpu.memory_space<vmem>>, %arg5: memref<1x32xf32, #tpu.memory_space<vmem>>, %arg6: memref<1x32xf32, #tpu.memory_space<vmem>>, %arg7: memref<16x32xbf16, #tpu.memory_space<vmem>>) attributes {dimension_semantics = [#tpu.dimension_semantics<parallel>], iteration_bounds = array<i64: 1>, scalar_prefetch = 0 : i64, scratch_operands = 0 : i64, tpu.core_type = #tpu.core_type<tc>, window_params = [{transform_indices = @transform_0, window_bounds = array<i64: 16, 32>}, {pipeline_mode = #tpu.pipeline_mode<synchronous>, transform_indices = @transform_1, window_bounds = array<i64: 32, 32>}, {pipeline_mode = #tpu.pipeline_mode<synchronous>, transform_indices = @transform_2, window_bounds = array<i64: 1, 32>}, {transform_indices = @transform_3, window_bounds = array<i64: 16, 32>}, {pipeline_mode = #tpu.pipeline_mode<synchronous>, transform_indices = @transform_4, window_bounds = array<i64: 1, 32>}, {pipeline_mode = #tpu.pipeline_mode<synchronous>, transform_indices = @transform_5, window_bounds = array<i64: 1, 32>}, {transform_indices = @transform_6, window_bounds = array<i64: 16, 32>}]} {
    %c0 = arith.constant 0 : index
    %c0_0 = arith.constant 0 : index
    %0 = vector.load %arg1[%c0, %c0_0] : memref<16x32xbf16, #tpu.memory_space<vmem>>, vector<16x32xbf16>
    %c0_1 = arith.constant 0 : index
    %c0_2 = arith.constant 0 : index
    %1 = vector.load %arg2[%c0_1, %c0_2] : memref<32x32xbf16, #tpu.memory_space<vmem>>, vector<32x32xbf16>
    %cst = arith.constant dense<0.000000e+00> : vector<16x32xf32>
    %2 = tpu.matmul %0, %1, %cst {dimension_numbers = #tpu.dot_dimension_numbers<[1], [0], [0], [1], [0, 0, 1, 1], [], []>} : vector<16x32xbf16>, vector<32x32xbf16>, vector<16x32xf32> -> vector<16x32xf32>
    %c0_3 = arith.constant 0 : index
    %c0_4 = arith.constant 0 : index
    %3 = vector.load %arg3[%c0_3, %c0_4] : memref<1x32xf32, #tpu.memory_space<vmem>>, vector<1x32xf32>
    %4 = vector.broadcast %3 : vector<1x32xf32> to vector<16x32xf32>
    %5 = arith.addf %2, %4 : vector<16x32xf32>
    %c0_5 = arith.constant 0 : index
    %c0_6 = arith.constant 0 : index
    %6 = vector.load %arg4[%c0_5, %c0_6] : memref<16x32xbf16, #tpu.memory_space<vmem>>, vector<16x32xbf16>
    %7 = arith.extf %6 : vector<16x32xbf16> to vector<16x32xf32>
    %8 = arith.addf %5, %7 : vector<16x32xf32>
    %cst_7 = arith.constant dense<0.000000e+00> : vector<16xf32>
    %9 = vector.multi_reduction <add>, %8, %cst_7 [1] : vector<16x32xf32> to vector<16xf32>
    %10 = vector.shape_cast %9 : vector<16xf32> to vector<16x1xf32>
    %cst_8 = arith.constant 3.200000e+01 : f32
    %11 = vector.broadcast %cst_8 : f32 to vector<16x1xf32>
    %12 = arith.divf %10, %11 : vector<16x1xf32>
    %13 = vector.broadcast %12 : vector<16x1xf32> to vector<16x32xf32>
    %14 = arith.subf %8, %13 : vector<16x32xf32>
    %15 = arith.mulf %14, %14 : vector<16x32xf32>
    %cst_9 = arith.constant dense<0.000000e+00> : vector<16xf32>
    %16 = vector.multi_reduction <add>, %15, %cst_9 [1] : vector<16x32xf32> to vector<16xf32>
    %17 = vector.shape_cast %16 : vector<16xf32> to vector<16x1xf32>
    %cst_10 = arith.constant 3.200000e+01 : f32
    %18 = vector.broadcast %cst_10 : f32 to vector<16x1xf32>
    %19 = arith.divf %17, %18 : vector<16x1xf32>
    %20 = vector.broadcast %12 : vector<16x1xf32> to vector<16x32xf32>
    %21 = arith.subf %8, %20 : vector<16x32xf32>
    %cst_11 = arith.constant 9.99999996E-13 : f32
    %22 = vector.broadcast %cst_11 : f32 to vector<16x1xf32>
    %23 = arith.addf %19, %22 : vector<16x1xf32>
    %24 = math.rsqrt %23 : vector<16x1xf32>
    %25 = vector.broadcast %24 : vector<16x1xf32> to vector<16x32xf32>
    %26 = arith.mulf %21, %25 : vector<16x32xf32>
    %c0_12 = arith.constant 0 : index
    %c0_13 = arith.constant 0 : index
    %27 = vector.load %arg5[%c0_12, %c0_13] : memref<1x32xf32, #tpu.memory_space<vmem>>, vector<1x32xf32>
    %28 = vector.broadcast %27 : vector<1x32xf32> to vector<16x32xf32>
    %29 = arith.mulf %26, %28 : vector<16x32xf32>
    %c0_14 = arith.constant 0 : index
    %c0_15 = arith.constant 0 : index
    %30 = vector.load %arg6[%c0_14, %c0_15] : memref<1x32xf32, #tpu.memory_space<vmem>>, vector<1x32xf32>
    %31 = vector.broadcast %30 : vector<1x32xf32> to vector<16x32xf32>
    %32 = arith.addf %29, %31 : vector<16x32xf32>
    %33 = arith.truncf %32 : vector<16x32xf32> to vector<16x32xbf16>
    %c0_16 = arith.constant 0 : index
    %c0_17 = arith.constant 0 : index
    %34 = vector.load %arg7[%c0_16, %c0_17] : memref<16x32xbf16, #tpu.memory_space<vmem>>, vector<16x32xbf16>
    tpu.vector_store %arg7[%c0_16, %c0_17], %33 {strides = array<i32>} : memref<16x32xbf16, #tpu.memory_space<vmem>>, vector<16x32xbf16>,
    return
  }
  func.func @transform_0(%arg0: i32) -> (i32, i32) {
    %c0_i32 = arith.constant 0 : i32
    %c0_i32_0 = arith.constant 0 : i32
    return %arg0, %c0_i32 : i32, i32
  }
  func.func @transform_1(%arg0: i32) -> (i32, i32) {
    %c0_i32 = arith.constant 0 : i32
    %c0_i32_0 = arith.constant 0 : i32
    %c0_i32_1 = arith.constant 0 : i32
    return %c0_i32, %c0_i32_0 : i32, i32
  }
  func.func @transform_2(%arg0: i32) -> (i32, i32) {
    %c0_i32 = arith.constant 0 : i32
    %c0_i32_0 = arith.constant 0 : i32
    %c0_i32_1 = arith.constant 0 : i32
    return %c0_i32, %c0_i32_0 : i32, i32
  }
  func.func @transform_3(%arg0: i32) -> (i32, i32) {
    %c0_i32 = arith.constant 0 : i32
    %c0_i32_0 = arith.constant 0 : i32
    return %arg0, %c0_i32 : i32, i32
  }
  func.func @transform_4(%arg0: i32) -> (i32, i32) {
    %c0_i32 = arith.constant 0 : i32
    %c0_i32_0 = arith.constant 0 : i32
    %c0_i32_1 = arith.constant 0 : i32
    return %c0_i32, %c0_i32_0 : i32, i32
  }
  func.func @transform_5(%arg0: i32) -> (i32, i32) {
    %c0_i32 = arith.constant 0 : i32
    %c0_i32_0 = arith.constant 0 : i32
    %c0_i32_1 = arith.constant 0 : i32
    return %c0_i32, %c0_i32_0 : i32, i32
  }
  func.func @transform_6(%arg0: i32) -> (i32, i32) {
    %c0_i32 = arith.constant 0 : i32
    %c0_i32_0 = arith.constant 0 : i32
    return %arg0, %c0_i32 : i32, i32
  }
}

module attributes {stable_mosaic.version = 11 : i64} {
  func.func @_linear_kernel(%arg0: i32, %arg1: memref<16x32xbf16, #tpu.memory_space<vmem>>, %arg2: memref<32x64xbf16, #tpu.memory_space<vmem>>, %arg3: memref<1x64xf32, #tpu.memory_space<vmem>>, %arg4: memref<16x64xbf16, #tpu.memory_space<vmem>>) attributes {dimension_semantics = [#tpu.dimension_semantics<parallel>], iteration_bounds = array<i64: 1>, scalar_prefetch = 0 : i64, scratch_operands = 0 : i64, tpu.core_type = #tpu.core_type<tc>, window_params = [{transform_indices = @transform_0, window_bounds = array<i64: 16, 32>}, {pipeline_mode = #tpu.pipeline_mode<synchronous>, transform_indices = @transform_1, window_bounds = array<i64: 32, 64>}, {pipeline_mode = #tpu.pipeline_mode<synchronous>, transform_indices = @transform_2, window_bounds = array<i64: 1, 64>}, {transform_indices = @transform_3, window_bounds = array<i64: 16, 64>}]} {
    %c0 = arith.constant 0 : index
    %c0_0 = arith.constant 0 : index
    %0 = vector.load %arg1[%c0, %c0_0] : memref<16x32xbf16, #tpu.memory_space<vmem>>, vector<16x32xbf16>
    %c0_1 = arith.constant 0 : index
    %c0_2 = arith.constant 0 : index
    %1 = vector.load %arg2[%c0_1, %c0_2] : memref<32x64xbf16, #tpu.memory_space<vmem>>, vector<32x64xbf16>
    %cst = arith.constant dense<0.000000e+00> : vector<16x64xf32>
    %2 = tpu.matmul %0, %1, %cst {dimension_numbers = #tpu.dot_dimension_numbers<[1], [0], [0], [1], [0, 0, 1, 1], [], []>} : vector<16x32xbf16>, vector<32x64xbf16>, vector<16x64xf32> -> vector<16x64xf32>
    %c0_3 = arith.constant 0 : index
    %c0_4 = arith.constant 0 : index
    %3 = vector.load %arg3[%c0_3, %c0_4] : memref<1x64xf32, #tpu.memory_space<vmem>>, vector<1x64xf32>
    %4 = vector.broadcast %3 : vector<1x64xf32> to vector<16x64xf32>
    %5 = arith.addf %2, %4 : vector<16x64xf32>
    %cst_5 = arith.constant 5.000000e-01 : f32
    %6 = vector.broadcast %cst_5 : f32 to vector<16x64xf32>
    %7 = arith.mulf %6, %5 : vector<16x64xf32>
    %cst_6 = arith.constant 4.471500e-02 : f32
    %8 = vector.broadcast %cst_6 : f32 to vector<16x64xf32>
    %9 = arith.mulf %8, %5 : vector<16x64xf32>
    %10 = arith.mulf %9, %5 : vector<16x64xf32>
    %11 = arith.mulf %10, %5 : vector<16x64xf32>
    %12 = arith.addf %5, %11 : vector<16x64xf32>
    %cst_7 = arith.constant 0.797884583 : f32
    %13 = vector.broadcast %cst_7 : f32 to vector<16x64xf32>
    %14 = arith.mulf %13, %12 : vector<16x64xf32>
    %15 = math.tanh %14 : vector<16x64xf32>
    %cst_8 = arith.constant 1.000000e+00 : f32
    %16 = vector.broadcast %cst_8 : f32 to vector<16x64xf32>
    %17 = arith.addf %16, %15 : vector<16x64xf32>
    %18 = arith.mulf %7, %17 : vector<16x64xf32>
    %19 = arith.truncf %18 : vector<16x64xf32> to vector<16x64xbf16>
    %c0_9 = arith.constant 0 : index
    %c0_10 = arith.constant 0 : index
    %20 = vector.load %arg4[%c0_9, %c0_10] : memref<16x64xbf16, #tpu.memory_space<vmem>>, vector<16x64xbf16>
    tpu.vector_store %arg4[%c0_9, %c0_10], %19 {strides = array<i32>} : memref<16x64xbf16, #tpu.memory_space<vmem>>, vector<16x64xbf16>,
    return
  }
  func.func @transform_0(%arg0: i32) -> (i32, i32) {
    %c0_i32 = arith.constant 0 : i32
    %c0_i32_0 = arith.constant 0 : i32
    return %arg0, %c0_i32 : i32, i32
  }
  func.func @transform_1(%arg0: i32) -> (i32, i32) {
    %c0_i32 = arith.constant 0 : i32
    %c0_i32_0 = arith.constant 0 : i32
    %c0_i32_1 = arith.constant 0 : i32
    return %c0_i32, %c0_i32_0 : i32, i32
  }
  func.func @transform_2(%arg0: i32) -> (i32, i32) {
    %c0_i32 = arith.constant 0 : i32
    %c0_i32_0 = arith.constant 0 : i32
    %c0_i32_1 = arith.constant 0 : i32
    return %c0_i32, %c0_i32_0 : i32, i32
  }
  func.func @transform_3(%arg0: i32) -> (i32, i32) {
    %c0_i32 = arith.constant 0 : i32
    %c0_i32_0 = arith.constant 0 : i32
    return %arg0, %c0_i32 : i32, i32
  }
}

module attributes {stable_mosaic.version = 11 : i64} {
  func.func @_linear_add_ln_kernel(%arg0: i32, %arg1: memref<16x64xbf16, #tpu.memory_space<vmem>>, %arg2: memref<64x32xbf16, #tpu.memory_space<vmem>>, %arg3: memref<1x32xf32, #tpu.memory_space<vmem>>, %arg4: memref<16x32xbf16, #tpu.memory_space<vmem>>, %arg5: memref<1x32xf32, #tpu.memory_space<vmem>>, %arg6: memref<1x32xf32, #tpu.memory_space<vmem>>, %arg7: memref<16x32xbf16, #tpu.memory_space<vmem>>) attributes {dimension_semantics = [#tpu.dimension_semantics<parallel>], iteration_bounds = array<i64: 1>, scalar_prefetch = 0 : i64, scratch_operands = 0 : i64, tpu.core_type = #tpu.core_type<tc>, window_params = [{transform_indices = @transform_0, window_bounds = array<i64: 16, 64>}, {pipeline_mode = #tpu.pipeline_mode<synchronous>, transform_indices = @transform_1, window_bounds = array<i64: 64, 32>}, {pipeline_mode = #tpu.pipeline_mode<synchronous>, transform_indices = @transform_2, window_bounds = array<i64: 1, 32>}, {transform_indices = @transform_3, window_bounds = array<i64: 16, 32>}, {pipeline_mode = #tpu.pipeline_mode<synchronous>, transform_indices = @transform_4, window_bounds = array<i64: 1, 32>}, {pipeline_mode = #tpu.pipeline_mode<synchronous>, transform_indices = @transform_5, window_bounds = array<i64: 1, 32>}, {transform_indices = @transform_6, window_bounds = array<i64: 16, 32>}]} {
    %c0 = arith.constant 0 : index
    %c0_0 = arith.constant 0 : index
    %0 = vector.load %arg1[%c0, %c0_0] : memref<16x64xbf16, #tpu.memory_space<vmem>>, vector<16x64xbf16>
    %c0_1 = arith.constant 0 : index
    %c0_2 = arith.constant 0 : index
    %1 = vector.load %arg2[%c0_1, %c0_2] : memref<64x32xbf16, #tpu.memory_space<vmem>>, vector<64x32xbf16>
    %cst = arith.constant dense<0.000000e+00> : vector<16x32xf32>
    %2 = tpu.matmul %0, %1, %cst {dimension_numbers = #tpu.dot_dimension_numbers<[1], [0], [0], [1], [0, 0, 1, 1], [], []>} : vector<16x64xbf16>, vector<64x32xbf16>, vector<16x32xf32> -> vector<16x32xf32>
    %c0_3 = arith.constant 0 : index
    %c0_4 = arith.constant 0 : index
    %3 = vector.load %arg3[%c0_3, %c0_4] : memref<1x32xf32, #tpu.memory_space<vmem>>, vector<1x32xf32>
    %4 = vector.broadcast %3 : vector<1x32xf32> to vector<16x32xf32>
    %5 = arith.addf %2, %4 : vector<16x32xf32>
    %c0_5 = arith.constant 0 : index
    %c0_6 = arith.constant 0 : index
    %6 = vector.load %arg4[%c0_5, %c0_6] : memref<16x32xbf16, #tpu.memory_space<vmem>>, vector<16x32xbf16>
    %7 = arith.extf %6 : vector<16x32xbf16> to vector<16x32xf32>
    %8 = arith.addf %5, %7 : vector<16x32xf32>
    %cst_7 = arith.constant dense<0.000000e+00> : vector<16xf32>
    %9 = vector.multi_reduction <add>, %8, %cst_7 [1] : vector<16x32xf32> to vector<16xf32>
    %10 = vector.shape_cast %9 : vector<16xf32> to vector<16x1xf32>
    %cst_8 = arith.constant 3.200000e+01 : f32
    %11 = vector.broadcast %cst_8 : f32 to vector<16x1xf32>
    %12 = arith.divf %10, %11 : vector<16x1xf32>
    %13 = vector.broadcast %12 : vector<16x1xf32> to vector<16x32xf32>
    %14 = arith.subf %8, %13 : vector<16x32xf32>
    %15 = arith.mulf %14, %14 : vector<16x32xf32>
    %cst_9 = arith.constant dense<0.000000e+00> : vector<16xf32>
    %16 = vector.multi_reduction <add>, %15, %cst_9 [1] : vector<16x32xf32> to vector<16xf32>
    %17 = vector.shape_cast %16 : vector<16xf32> to vector<16x1xf32>
    %cst_10 = arith.constant 3.200000e+01 : f32
    %18 = vector.broadcast %cst_10 : f32 to vector<16x1xf32>
    %19 = arith.divf %17, %18 : vector<16x1xf32>
    %20 = vector.broadcast %12 : vector<16x1xf32> to vector<16x32xf32>
    %21 = arith.subf %8, %20 : vector<16x32xf32>
    %cst_11 = arith.constant 9.99999996E-13 : f32
    %22 = vector.broadcast %cst_11 : f32 to vector<16x1xf32>
    %23 = arith.addf %19, %22 : vector<16x1xf32>
    %24 = math.rsqrt %23 : vector<16x1xf32>
    %25 = vector.broadcast %24 : vector<16x1xf32> to vector<16x32xf32>
    %26 = arith.mulf %21, %25 : vector<16x32xf32>
    %c0_12 = arith.constant 0 : index
    %c0_13 = arith.constant 0 : index
    %27 = vector.load %arg5[%c0_12, %c0_13] : memref<1x32xf32, #tpu.memory_space<vmem>>, vector<1x32xf32>
    %28 = vector.broadcast %27 : vector<1x32xf32> to vector<16x32xf32>
    %29 = arith.mulf %26, %28 : vector<16x32xf32>
    %c0_14 = arith.constant 0 : index
    %c0_15 = arith.constant 0 : index
    %30 = vector.load %arg6[%c0_14, %c0_15] : memref<1x32xf32, #tpu.memory_space<vmem>>, vector<1x32xf32>
    %31 = vector.broadcast %30 : vector<1x32xf32> to vector<16x32xf32>
    %32 = arith.addf %29, %31 : vector<16x32xf32>
    %33 = arith.truncf %32 : vector<16x32xf32> to vector<16x32xbf16>
    %c0_16 = arith.constant 0 : index
    %c0_17 = arith.constant 0 : index
    %34 = vector.load %arg7[%c0_16, %c0_17] : memref<16x32xbf16, #tpu.memory_space<vmem>>, vector<16x32xbf16>
    tpu.vector_store %arg7[%c0_16, %c0_17], %33 {strides = array<i32>} : memref<16x32xbf16, #tpu.memory_space<vmem>>, vector<16x32xbf16>,
    return
  }
  func.func @transform_0(%arg0: i32) -> (i32, i32) {
    %c0_i32 = arith.constant 0 : i32
    %c0_i32_0 = arith.constant 0 : i32
    return %arg0, %c0_i32 : i32, i32
  }
  func.func @transform_1(%arg0: i32) -> (i32, i32) {
    %c0_i32 = arith.constant 0 : i32
    %c0_i32_0 = arith.constant 0 : i32
    %c0_i32_1 = arith.constant 0 : i32
    return %c0_i32, %c0_i32_0 : i32, i32
  }
  func.func @transform_2(%arg0: i32) -> (i32, i32) {
    %c0_i32 = arith.constant 0 : i32
    %c0_i32_0 = arith.constant 0 : i32
    %c0_i32_1 = arith.constant 0 : i32
    return %c0_i32, %c0_i32_0 : i32, i32
  }
  func.func @transform_3(%arg0: i32) -> (i32, i32) {
    %c0_i32 = arith.constant 0 : i32
    %c0_i32_0 = arith.constant 0 : i32
    return %arg0, %c0_i32 : i32, i32
  }
  func.func @transform_4(%arg0: i32) -> (i32, i32) {
    %c0_i32 = arith.constant 0 : i32
    %c0_i32_0 = arith.constant 0 : i32
    %c0_i32_1 = arith.constant 0 : i32
    return %c0_i32, %c0_i32_0 : i32, i32
  }
  func.func @transform_5(%arg0: i32) -> (i32, i32) {
    %c0_i32 = arith.constant 0 : i32
    %c0_i32_0 = arith.constant 0 : i32
    %c0_i32_1 = arith.constant 0 : i32
    return %c0_i32, %c0_i32_0 : i32, i32
  }
  func.func @transform_6(%arg0: i32) -> (i32, i32) {
    %c0_i32 = arith.constant 0 : i32
    %c0_i32_0 = arith.constant 0 : i32
    return %arg0, %c0_i32 : i32, i32
  }
}

module attributes {stable_mosaic.version = 11 : i64} {
  func.func @_pool_cls_kernel(%arg0: memref<2x32xbf16, #tpu.memory_space<vmem>>, %arg1: memref<32x32xbf16, #tpu.memory_space<vmem>>, %arg2: memref<1x32xf32, #tpu.memory_space<vmem>>, %arg3: memref<32x128xbf16, #tpu.memory_space<vmem>>, %arg4: memref<1x128xf32, #tpu.memory_space<vmem>>, %arg5: memref<2x128xf32, #tpu.memory_space<vmem>>) attributes {dimension_semantics = [], scalar_prefetch = 0 : i64, scratch_operands = 0 : i64, tpu.core_type = #tpu.core_type<tc>} {
    %c0 = arith.constant 0 : index
    %c0_0 = arith.constant 0 : index
    %0 = vector.load %arg0[%c0, %c0_0] : memref<2x32xbf16, #tpu.memory_space<vmem>>, vector<2x32xbf16>
    %c0_1 = arith.constant 0 : index
    %c0_2 = arith.constant 0 : index
    %1 = vector.load %arg1[%c0_1, %c0_2] : memref<32x32xbf16, #tpu.memory_space<vmem>>, vector<32x32xbf16>
    %cst = arith.constant dense<0.000000e+00> : vector<2x32xf32>
    %2 = tpu.matmul %0, %1, %cst {dimension_numbers = #tpu.dot_dimension_numbers<[1], [0], [0], [1], [0, 0, 1, 1], [], []>} : vector<2x32xbf16>, vector<32x32xbf16>, vector<2x32xf32> -> vector<2x32xf32>
    %c0_3 = arith.constant 0 : index
    %c0_4 = arith.constant 0 : index
    %3 = vector.load %arg2[%c0_3, %c0_4] : memref<1x32xf32, #tpu.memory_space<vmem>>, vector<1x32xf32>
    %4 = vector.broadcast %3 : vector<1x32xf32> to vector<2x32xf32>
    %5 = arith.addf %2, %4 : vector<2x32xf32>
    %6 = math.tanh %5 : vector<2x32xf32>
    %7 = arith.truncf %6 : vector<2x32xf32> to vector<2x32xbf16>
    %c0_5 = arith.constant 0 : index
    %c0_6 = arith.constant 0 : index
    %8 = vector.load %arg3[%c0_5, %c0_6] : memref<32x128xbf16, #tpu.memory_space<vmem>>, vector<32x128xbf16>
    %cst_7 = arith.constant dense<0.000000e+00> : vector<2x128xf32>
    %9 = tpu.matmul %7, %8, %cst_7 {dimension_numbers = #tpu.dot_dimension_numbers<[1], [0], [0], [1], [0, 0, 1, 1], [], []>} : vector<2x32xbf16>, vector<32x128xbf16>, vector<2x128xf32> -> vector<2x128xf32>
    %c0_8 = arith.constant 0 : index
    %c0_9 = arith.constant 0 : index
    %10 = vector.load %arg4[%c0_8, %c0_9] : memref<1x128xf32, #tpu.memory_space<vmem>>, vector<1x128xf32>
    %11 = vector.broadcast %10 : vector<1x128xf32> to vector<2x128xf32>
    %12 = arith.addf %9, %11 : vector<2x128xf32>
    %c0_10 = arith.constant 0 : index
    %c0_11 = arith.constant 0 : index
    %13 = vector.load %arg5[%c0_10, %c0_11] : memref<2x128xf32, #tpu.memory_space<vmem>>, vector<2x128xf32>
    tpu.vector_store %arg5[%c0_10, %c0_11], %12 {strides = array<i32>} : memref<2x128xf32, #tpu.memory_space<vmem>>, vector<2x128xf32>,
    return
  }
}

</mosaic_0001>

<llo_original>
// kernel: emotion_classifier_forward.12
$region0: #{emotion_classifier_forward.12}
  #allocation0 [shape = 'u32[]', space=smem, size = 0x4, offset = 0x4, fixed_abs, tag = 'smem constant byte address 0x4 - core index']
  #allocation1 [shape = 'u32[72,128]{1,0:T(1,128)}', space=vmem, size = 0x9000, scoped, tag = 'internal scratch']
  %s0 = inlined_call_operand.vmem [shape: f32[2,8,32], index: 0, kind: input, shape index: {}]
  %s1 = inlined_call_operand.vmem [shape: f32[8,32], index: 1, kind: input, shape index: {}]
  %s2 = inlined_call_operand.vmem [shape: f32[1,32], index: 2, kind: input, shape index: {}]
  %s3 = inlined_call_operand.vmem [shape: f32[1,32], index: 3, kind: input, shape index: {}]
  %s4 = inlined_call_operand.vmem [shape: bf16[2,8,32], index: 4, kind: output, shape index: {}]
  %s5 = sld [smem:[#allocation0]]
  $region49: #{emotion_classifier_forward.12} parent=0
    _
  %s7 = ssub.s32 1, %s5
  %s8 = scalar_select 0, %s7, %s5
  loop: start=0, step=1, limit=4
  $region2: #{emotion_classifier_forward.12} parent=0 // loop_pre_header
    _
  $region3: #{emotion_classifier_forward.12} parent=0 // loop_header
    %s10 = sphi 0, %s14
    %p11 = scmp.ge.s32.totalorder %s10, 4
    %s20 = sphi 0, %s22
    %s23 = sphi 0, %s20
    %s24 = sphi 0, %s23
    %s40 = sphi 0, %s24
    %s44 = sphi 0, %s44
    %s46 = sphi 0, %s44
    %s47 = sphi 0, %s46
    %s61 = sphi 0, %s47
    %s65 = sphi 0, %s65
    %s67 = sphi 0, %s65
    %s68 = sphi 0, %s67
    %s82 = sphi 0, %s68
    %s86 = sphi 0, %s86
    %s88 = sphi 0, %s86
    %s89 = sphi 0, %s88
    %s103 = sphi 0, %s89
    %s109 = sphi 0, %s111
    %s112 = sphi 0, %s109
    %s113 = sphi 0, %s112
    %s129 = sphi 0, %s113
  $region4: #{emotion_classifier_forward.12} parent=0 // loop_header_branch
    %13 = sbr.rel (%p11) target = $region8
  $region5: #{emotion_classifier_forward.12} parent=0 // loop_body
    %s15 = ssub.s32 %s10, 1
    %s16 = ssub.s32 %s10, 2
    %s17 = sadd.s32 %s10, 1
    %s18 = ssub.s32 %s10, %s17
    %p19 = scmp.eq.s32.totalorder %s18, 0
    %s21 = sadd.s32 %s20, 1
    %s22 = scalar_select %p19, %s20, %s21
    %p25 = pneg %p19
    %p26 = scmp.eq.s32.totalorder %s10, 1
    %p27 = por %p25, %p26
    %p28 = scmp.ne.s32.totalorder %s20, %s23
    %p29 = scmp.eq.s32.totalorder %s10, 0
    %p30 = por %p28, %p29
    %p31 = scmp.ne.s32.totalorder %s20, %s23
    %p32 = scmp.eq.s32.totalorder %s15, 1
    %p33 = por %p31, %p32
    %p34 = scmp.ne.s32.totalorder %s23, %s24
    %p35 = scmp.eq.s32.totalorder %s15, 0
    %p36 = por %p34, %p35
    %p37 = scmp.ne.s32.totalorder %s23, %s24
    %p38 = scmp.eq.s32.totalorder %s16, 1
    %p39 = por %p37, %p38
    %p41 = scmp.ne.s32.totalorder %s24, %s40
    %p42 = scmp.eq.s32.totalorder %s16, 0
    %p43 = por %p41, %p42
    %s45 = sadd.s32 %s44, 1
    %p48 = scmp.eq.s32.totalorder %s10, 1
    %p49 = scmp.ne.s32.totalorder %s44, %s46
    %p50 = scmp.eq.s32.totalorder %s10, 0
    %p51 = por %p49, %p50
    %p52 = scmp.ne.s32.totalorder %s44, %s46
    %p53 = scmp.eq.s32.totalorder %s15, 1
    %p54 = por %p52, %p53
    %p55 = scmp.ne.s32.totalorder %s46, %s47
    %p56 = scmp.eq.s32.totalorder %s15, 0
    %p57 = por %p55, %p56
    %p58 = scmp.ne.s32.totalorder %s46, %s47
    %p59 = scmp.eq.s32.totalorder %s16, 1
    %p60 = por %p58, %p59
    %p62 = scmp.ne.s32.totalorder %s47, %s61
    %p63 = scmp.eq.s32.totalorder %s16, 0
    %p64 = por %p62, %p63
    %s66 = sadd.s32 %s65, 1
    %p69 = scmp.eq.s32.totalorder %s10, 1
    %p70 = scmp.ne.s32.totalorder %s65, %s67
    %p71 = scmp.eq.s32.totalorder %s10, 0
    %p72 = por %p70, %p71
    %p73 = scmp.ne.s32.totalorder %s65, %s67
    %p74 = scmp.eq.s32.totalorder %s15, 1
    %p75 = por %p73, %p74
    %p76 = scmp.ne.s32.totalorder %s67, %s68
    %p77 = scmp.eq.s32.totalorder %s15, 0
    %p78 = por %p76, %p77
    %p79 = scmp.ne.s32.totalorder %s67, %s68
    %p80 = scmp.eq.s32.totalorder %s16, 1
    %p81 = por %p79, %p80
    %p83 = scmp.ne.s32.totalorder %s68, %s82
    %p84 = scmp.eq.s32.totalorder %s16, 0
    %p85 = por %p83, %p84
    %s87 = sadd.s32 %s86, 1
    %p90 = scmp.eq.s32.totalorder %s10, 1
    %p91 = scmp.ne.s32.totalorder %s86, %s88
    %p92 = scmp.eq.s32.totalorder %s10, 0
    %p93 = por %p91, %p92
    %p94 = scmp.ne.s32.totalorder %s86, %s88
    %p95 = scmp.eq.s32.totalorder %s15, 1
    %p96 = por %p94, %p95
    %p97 = scmp.ne.s32.totalorder %s88, %s89
    %p98 = scmp.eq.s32.totalorder %s15, 0
    %p99 = por %p97, %p98
    %p100 = scmp.ne.s32.totalorder %s88, %s89
    %p101 = scmp.eq.s32.totalorder %s16, 1
    %p102 = por %p100, %p101
    %p104 = scmp.ne.s32.totalorder %s89, %s103
    %p105 = scmp.eq.s32.totalorder %s16, 0
    %p106 = por %p104, %p105
    %s107 = ssub.s32 %s10, %s17
    %p108 = scmp.eq.s32.totalorder %s107, 0
    %s110 = sadd.s32 %s109, 1
    %s111 = scalar_select %p108, %s109, %s110
    %p114 = pneg %p108
    %p115 = scmp.eq.s32.totalorder %s10, 1
    %p116 = por %p114, %p115
    %p117 = scmp.ne.s32.totalorder %s109, %s112
    %p118 = scmp.eq.s32.totalorder %s10, 0
    %p119 = por %p117, %p118
    %p120 = scmp.ne.s32.totalorder %s109, %s112
    %p121 = scmp.eq.s32.totalorder %s15, 1
    %p122 = por %p120, %p121
    %p123 = scmp.ne.s32.totalorder %s112, %s113
    %p124 = scmp.eq.s32.totalorder %s15, 0
    %p125 = por %p123, %p124
    %p126 = scmp.ne.s32.totalorder %s112, %s113
    %p127 = scmp.eq.s32.totalorder %s16, 1
    %p128 = por %p126, %p127
    %p130 = scmp.ne.s32.totalorder %s113, %s129
    %p131 = scmp.eq.s32.totalorder %s16, 0
    %p132 = por %p130, %p131
    %p133 = scmp.le.s32.totalorder 1, %s10
    %p134 = scmp.lt.s32.totalorder %s10, 3
    %p135 = pnand %p133, %p134
    %p136 = pneg %p135
    // Predicated region
    $region9: #{emotion_classifier_forward.12} parent=5 // pred_check
      _
    $region10: #{emotion_classifier_forward.12} parent=5 // pred_check_branch
      %138 = sbr.rel (%p135) target = $region12
    $region11: #{emotion_classifier_forward.12} parent=5 // pred_region
      %s139 = ssub.s32 %s10, 1
      // Predicated region
      $region13: #{emotion_classifier_forward.12} parent=11 // pred_check
        %p140 = pneg %p57
      $region14: #{emotion_classifier_forward.12} parent=11 // pred_check_branch
        %142 = sbr.rel (%p140) target = $region16
      $region15: #{emotion_classifier_forward.12} parent=11 // pred_region
        _
      $region16: #{emotion_classifier_forward.12} parent=11 // pred_fallthru
        _
      // Predicated region
      $region17: #{emotion_classifier_forward.12} parent=11 // pred_check
        %p143 = pneg %p78
      $region18: #{emotion_classifier_forward.12} parent=11 // pred_check_branch
        %145 = sbr.rel (%p143) target = $region20
      $region19: #{emotion_classifier_forward.12} parent=11 // pred_region
        _
      $region20: #{emotion_classifier_forward.12} parent=11 // pred_fallthru
        _
      // Predicated region
      $region21: #{emotion_classifier_forward.12} parent=11 // pred_check
        %p146 = pneg %p99
      $region22: #{emotion_classifier_forward.12} parent=11 // pred_check_branch
        %148 = sbr.rel (%p146) target = $region24
      $region23: #{emotion_classifier_forward.12} parent=11 // pred_region
        _
      $region24: #{emotion_classifier_forward.12} parent=11 // pred_fallthru
        _
    $region12: #{emotion_classifier_forward.12} parent=5 // pred_fallthru
      _
    %p149 = scmp.lt.s32.totalorder %s10, 2
    // Predicated region
    $region25: #{emotion_classifier_forward.12} parent=5 // pred_check
      %p150 = pneg %p149
    $region26: #{emotion_classifier_forward.12} parent=5 // pred_check_branch
      %152 = sbr.rel (%p150) target = $region28
    $region27: #{emotion_classifier_forward.12} parent=5 // pred_region
      // Predicated region
      $region29: #{emotion_classifier_forward.12} parent=27 // pred_check
        %p153 = pneg %p30
      $region30: #{emotion_classifier_forward.12} parent=27 // pred_check_branch
        %155 = sbr.rel (%p153) target = $region32
      $region31: #{emotion_classifier_forward.12} parent=27 // pred_region
        %p156 = scmp.lt.s32.totalorder %s10, 1
        %s157 = scalar_select %p156, %s10, 1
        %s158 = smul.addr %s157, 8
        %s159 = scalar_lea.vmem %s0, %s158
      $region32: #{emotion_classifier_forward.12} parent=27 // pred_fallthru
        _
    $region28: #{emotion_classifier_forward.12} parent=5 // pred_fallthru
      _
    %p160 = scmp.le.s32.totalorder 1, %s10
    %p161 = scmp.lt.s32.totalorder %s10, 3
    %p162 = pnand %p160, %p161
    %p163 = pneg %p162
    // Predicated region
    $region33: #{emotion_classifier_forward.12} parent=5 // pred_check
      _
    $region34: #{emotion_classifier_forward.12} parent=5 // pred_check_branch
      %165 = sbr.rel (%p162) target = $region36
    $region35: #{emotion_classifier_forward.12} parent=5 // pred_region
      %s166 = ssub.s32 %s10, 1
      %p167 = scmp.lt.s32.totalorder %s15, 1
      %s168 = scalar_select %p167, %s15, 1
      %s169 = smul.addr %s168, 8
      %s170 = scalar_lea.vmem %s0, %s169
      %p171 = pneg %p36
      %p172 = pneg %p33
      %p173 = pneg %p57
      %p174 = pneg %p54
      %p175 = pneg %p78
      %p176 = pneg %p75
      %p177 = pneg %p99
      %p178 = pneg %p96
      %p179 = pneg %p125
      %p180 = pneg %p122
      %p181 = scmp.lt.s32.totalorder %s15, 1
      %s182 = scalar_select %p181, %s15, 1
      %s183 = smul.addr %s182, 4
      %s184 = scalar_lea.vmem %s4, %s183
      %p185 = scmp.lt.s32.totalorder %s15, 1
      %s186 = scalar_select %p185, %s15, 1
      %s187 = smul.addr %s186, 8
      %s188 = scalar_lea.vmem %s0, %s187
      %p189 = scmp.lt.s32.totalorder %s15, 1
      %s190 = scalar_select %p189, %s15, 1
      %s191 = smul.addr %s190, 4
      %s192 = scalar_lea.vmem %s4, %s191
      %v193 = vld [vmem:[%s188] sm:$0xff]
      %v194 = vld [vmem:[%s1] sm:$0xff]
      %v195 = vadd.f32 %v193, %v194
      %vm196 = vcmask 261120
      %v197 = vsel %vm196, %v195, 0.0
      %198 = vadd.xlane.f32.xlu0 %v197
      %v199 = vpop.xlane.xlu0 %198
      %v200 = vrcp.pop 32.0
      %v201 = vmul.f32 32.0, %v200
      %v202 = vsub.f32 1.0, %v201
      %v203 = vmul.f32 %v200, %v202
      %v204 = vadd.f32 %v200, %v203
      %vm205 = vweird.f32 %v200
      %v206 = vsel %vm205, %v200, %v204
      %v207 = vmul.f32 %v199, %v206
      %v208 = vsub.f32 %v195, %v207
      %v209 = vmul.f32 %v208, %v208
      %v210 = vsel %vm196, %v209, 0.0
      %211 = vadd.xlane.f32.xlu0 %v210
      %v212 = vpop.xlane.xlu0 %211
      %v213 = vmul.f32 %v212, %v206
      %v214 = vadd.f32 %v213, 1e-12
      %v215 = vrsqrt.pop %v214
      %v216 = vmul.f32 %v215, %v214
      %v217 = vmul.f32 %v216, %v215
      %v218 = vmul.f32 0.5, %v217
      %v219 = vsub.f32 1.5, %v218
      %v220 = vmul.f32 %v215, %v219
      %vm221 = vweird.f32 %v214
      %vm222 = vweird.f32 %v215
      %vm223 = vmor %vm221, %vm222
      %v224 = vsel %vm223, %v215, %v220
      %v225 = vmul.f32 %v208, %v224
      %v226 = vld [vmem:[%s2] sm:$0x1]
      %v228 = vperm.slane %v226, 0
      %v230 = vmul.f32 %v225, %v228
      %v231 = vld [vmem:[%s3] sm:$0x1]
      %v233 = vperm.slane %v231, 0
      %v235 = vadd.f32 %v230, %v233
      %v236 = vpack.c.bf16 %v235, %v235
      %vm237 = vcmask 257024
      %238 = vst.msk [vmem:[%s192] sm:$0xf] %vm237, %v236
      %p239 = scmp.lt.s32.totalorder %s15, 1
      %s240 = scalar_select %p239, %s15, 1
      %s241 = smul.addr %s240, 4
      %s242 = scalar_lea.vmem %s4, %s241
      // Predicated region
      $region37: #{emotion_classifier_forward.12} parent=35 // pred_check
        %p243 = pneg %p122
      $region38: #{emotion_classifier_forward.12} parent=35 // pred_check_branch
        %245 = sbr.rel (%p243) target = $region40
      $region39: #{emotion_classifier_forward.12} parent=35 // pred_region
        _
      $region40: #{emotion_classifier_forward.12} parent=35 // pred_fallthru
        _
    $region36: #{emotion_classifier_forward.12} parent=5 // pred_fallthru
      _
    %p246 = scmp.le.s32.totalorder 2, %s10
    // Predicated region
    $region41: #{emotion_classifier_forward.12} parent=5 // pred_check
      %p247 = pneg %p246
    $region42: #{emotion_classifier_forward.12} parent=5 // pred_check_branch
      %249 = sbr.rel (%p247) target = $region44
    $region43: #{emotion_classifier_forward.12} parent=5 // pred_region
      %s250 = ssub.s32 %s10, 2
      // Predicated region
      $region45: #{emotion_classifier_forward.12} parent=43 // pred_check
        %p251 = pneg %p128
      $region46: #{emotion_classifier_forward.12} parent=43 // pred_check_branch
        %253 = sbr.rel (%p251) target = $region48
      $region47: #{emotion_classifier_forward.12} parent=43 // pred_region
        %p254 = scmp.lt.s32.totalorder %s16, 1
        %s255 = scalar_select %p254, %s16, 1
        %s256 = smul.addr %s255, 4
        %s257 = scalar_lea.vmem %s4, %s256
      $region48: #{emotion_classifier_forward.12} parent=43 // pred_fallthru
        _
    $region44: #{emotion_classifier_forward.12} parent=5 // pred_fallthru
      _
  $region6: #{emotion_classifier_forward.12} parent=0 // loop_footer
    %s14 = sadd.s32 1, %s10
  $region7: #{emotion_classifier_forward.12} parent=0 // loop_footer_branch
    %9 = sbr.rel target = $region3
  $region8: #{emotion_classifier_forward.12} parent=0 // loop_exit
    _

// kernel: emotion_classifier_forward.14
$region0: #{emotion_classifier_forward.14}
  #allocation0 [shape = 'u32[]', space=smem, size = 0x4, offset = 0x4, fixed_abs, tag = 'smem constant byte address 0x4 - core index']
  #allocation1 [shape = 'u32[72,128]{1,0:T(1,128)}', space=vmem, size = 0x9000, scoped, tag = 'internal scratch']
  %s0 = inlined_call_operand.vmem [shape: bf16[2,2,8,16], index: 0, kind: input, shape index: {}]
  %s1 = inlined_call_operand.vmem [shape: bf16[2,2,8,16], index: 1, kind: input, shape index: {}]
  %s2 = inlined_call_operand.vmem [shape: bf16[2,2,8,16], index: 2, kind: input, shape index: {}]
  %s3 = inlined_call_operand.vmem [shape: f32[2,1,8], index: 3, kind: input, shape index: {}]
  %s4 = inlined_call_operand.vmem [shape: bf16[2,2,8,16], index: 4, kind: output, shape index: {}]
  %s5 = sld [smem:[#allocation0]]
  $region49: #{emotion_classifier_forward.14} parent=0
    _
  %s7 = ssub.s32 1, %s5
  %s8 = scalar_select 0, %s7, %s5
  loop: start=0, step=1, limit=6
  $region2: #{emotion_classifier_forward.14} parent=0 // loop_pre_header
    _
  $region3: #{emotion_classifier_forward.14} parent=0 // loop_header
    %s10 = sphi 0, %s14
    %p11 = scmp.ge.s32.totalorder %s10, 6
    %s17 = sphi 0, %s29
    %s18 = sphi 0, %s25
    %s19 = sphi 0, %s17
    %s20 = sphi 0, %s18
    %s21 = sphi 0, %s19
    %s22 = sphi 0, %s20
    %s34 = sphi 0, %s36
    %s37 = sphi 0, %s34
    %s38 = sphi 0, %s37
    %s54 = sphi 0, %s38
    %s62 = sphi 0, %s64
    %s65 = sphi 0, %s62
    %s66 = sphi 0, %s65
    %s82 = sphi 0, %s66
    %s90 = sphi 0, %s92
    %s93 = sphi 0, %s90
    %s94 = sphi 0, %s93
    %s110 = sphi 0, %s94
    %s116 = sphi 0, %s118
    %s119 = sphi 0, %s116
    %s120 = sphi 0, %s119
    %s136 = sphi 0, %s120
    %s144 = sphi 0, %s146
    %s147 = sphi 0, %s144
    %s148 = sphi 0, %s147
    %s164 = sphi 0, %s148
  $region4: #{emotion_classifier_forward.14} parent=0 // loop_header_branch
    %13 = sbr.rel (%p11) target = $region8
  $region5: #{emotion_classifier_forward.14} parent=0 // loop_body
    %s15 = ssub.s32 %s10, 1
    %s16 = ssub.s32 %s10, 2
    %s23 = sadd.s32 1, %s18
    %p24 = scmp.ge.s32.totalorder %s23, 2
    %s25 = scalar_select %p24, 0, %s23
    %s26 = sadd.s32 1, %s17
    %s27 = scalar_select %p24, %s26, %s17
    %p28 = scmp.ge.s32.totalorder %s27, 2
    %s29 = scalar_select %p28, 0, %s27
    %s30 = ssub.s32 %s17, %s29
    %s31 = ssub.s32 %s18, %s25
    %s32 = sor.u32 %s30, %s31
    %p33 = scmp.eq.s32.totalorder %s32, 0
    %s35 = sadd.s32 %s34, 1
    %s36 = scalar_select %p33, %s34, %s35
    %p39 = pneg %p33
    %p40 = scmp.eq.s32.totalorder %s10, 3
    %p41 = por %p39, %p40
    %p42 = scmp.ne.s32.totalorder %s34, %s37
    %p43 = scmp.eq.s32.totalorder %s10, 0
    %p44 = por %p42, %p43
    %p45 = scmp.ne.s32.totalorder %s34, %s37
    %p46 = scmp.eq.s32.totalorder %s15, 3
    %p47 = por %p45, %p46
    %p48 = scmp.ne.s32.totalorder %s37, %s38
    %p49 = scmp.eq.s32.totalorder %s15, 0
    %p50 = por %p48, %p49
    %p51 = scmp.ne.s32.totalorder %s37, %s38
    %p52 = scmp.eq.s32.totalorder %s16, 3
    %p53 = por %p51, %p52
    %p55 = scmp.ne.s32.totalorder %s38, %s54
    %p56 = scmp.eq.s32.totalorder %s16, 0
    %p57 = por %p55, %p56
    %s58 = ssub.s32 %s17, %s29
    %s59 = ssub.s32 %s18, %s25
    %s60 = sor.u32 %s58, %s59
    %p61 = scmp.eq.s32.totalorder %s60, 0
    %s63 = sadd.s32 %s62, 1
    %s64 = scalar_select %p61, %s62, %s63
    %p67 = pneg %p61
    %p68 = scmp.eq.s32.totalorder %s10, 3
    %p69 = por %p67, %p68
    %p70 = scmp.ne.s32.totalorder %s62, %s65
    %p71 = scmp.eq.s32.totalorder %s10, 0
    %p72 = por %p70, %p71
    %p73 = scmp.ne.s32.totalorder %s62, %s65
    %p74 = scmp.eq.s32.totalorder %s15, 3
    %p75 = por %p73, %p74
    %p76 = scmp.ne.s32.totalorder %s65, %s66
    %p77 = scmp.eq.s32.totalorder %s15, 0
    %p78 = por %p76, %p77
    %p79 = scmp.ne.s32.totalorder %s65, %s66
    %p80 = scmp.eq.s32.totalorder %s16, 3
    %p81 = por %p79, %p80
    %p83 = scmp.ne.s32.totalorder %s66, %s82
    %p84 = scmp.eq.s32.totalorder %s16, 0
    %p85 = por %p83, %p84
    %s86 = ssub.s32 %s17, %s29
    %s87 = ssub.s32 %s18, %s25
    %s88 = sor.u32 %s86, %s87
    %p89 = scmp.eq.s32.totalorder %s88, 0
    %s91 = sadd.s32 %s90, 1
    %s92 = scalar_select %p89, %s90, %s91
    %p95 = pneg %p89
    %p96 = scmp.eq.s32.totalorder %s10, 3
    %p97 = por %p95, %p96
    %p98 = scmp.ne.s32.totalorder %s90, %s93
    %p99 = scmp.eq.s32.totalorder %s10, 0
    %p100 = por %p98, %p99
    %p101 = scmp.ne.s32.totalorder %s90, %s93
    %p102 = scmp.eq.s32.totalorder %s15, 3
    %p103 = por %p101, %p102
    %p104 = scmp.ne.s32.totalorder %s93, %s94
    %p105 = scmp.eq.s32.totalorder %s15, 0
    %p106 = por %p104, %p105
    %p107 = scmp.ne.s32.totalorder %s93, %s94
    %p108 = scmp.eq.s32.totalorder %s16, 3
    %p109 = por %p107, %p108
    %p111 = scmp.ne.s32.totalorder %s94, %s110
    %p112 = scmp.eq.s32.totalorder %s16, 0
    %p113 = por %p111, %p112
    %s114 = ssub.s32 %s17, %s29
    %p115 = scmp.eq.s32.totalorder %s114, 0
    %s117 = sadd.s32 %s116, 1
    %s118 = scalar_select %p115, %s116, %s117
    %p121 = pneg %p115
    %p122 = scmp.eq.s32.totalorder %s10, 3
    %p123 = por %p121, %p122
    %p124 = scmp.ne.s32.totalorder %s116, %s119
    %p125 = scmp.eq.s32.totalorder %s10, 0
    %p126 = por %p124, %p125
    %p127 = scmp.ne.s32.totalorder %s116, %s119
    %p128 = scmp.eq.s32.totalorder %s15, 3
    %p129 = por %p127, %p128
    %p130 = scmp.ne.s32.totalorder %s119, %s120
    %p131 = scmp.eq.s32.totalorder %s15, 0
    %p132 = por %p130, %p131
    %p133 = scmp.ne.s32.totalorder %s119, %s120
    %p134 = scmp.eq.s32.totalorder %s16, 3
    %p135 = por %p133, %p134
    %p137 = scmp.ne.s32.totalorder %s120, %s136
    %p138 = scmp.eq.s32.totalorder %s16, 0
    %p139 = por %p137, %p138
    %s140 = ssub.s32 %s17, %s29
    %s141 = ssub.s32 %s18, %s25
    %s142 = sor.u32 %s140, %s141
    %p143 = scmp.eq.s32.totalorder %s142, 0
    %s145 = sadd.s32 %s144, 1
    %s146 = scalar_select %p143, %s144, %s145
    %p149 = pneg %p143
    %p150 = scmp.eq.s32.totalorder %s10, 3
    %p151 = por %p149, %p150
    %p152 = scmp.ne.s32.totalorder %s144, %s147
    %p153 = scmp.eq.s32.totalorder %s10, 0
    %p154 = por %p152, %p153
    %p155 = scmp.ne.s32.totalorder %s144, %s147
    %p156 = scmp.eq.s32.totalorder %s15, 3
    %p157 = por %p155, %p156
    %p158 = scmp.ne.s32.totalorder %s147, %s148
    %p159 = scmp.eq.s32.totalorder %s15, 0
    %p160 = por %p158, %p159
    %p161 = scmp.ne.s32.totalorder %s147, %s148
    %p162 = scmp.eq.s32.totalorder %s16, 3
    %p163 = por %p161, %p162
    %p165 = scmp.ne.s32.totalorder %s148, %s164
    %p166 = scmp.eq.s32.totalorder %s16, 0
    %p167 = por %p165, %p166
    %p168 = scmp.le.s32.totalorder 1, %s10
    %p169 = scmp.lt.s32.totalorder %s10, 5
    %p170 = pnand %p168, %p169
    %p171 = pneg %p170
    // Predicated region
    $region9: #{emotion_classifier_forward.14} parent=5 // pred_check
      _
    $region10: #{emotion_classifier_forward.14} parent=5 // pred_check_branch
      %173 = sbr.rel (%p170) target = $region12
    $region11: #{emotion_classifier_forward.14} parent=5 // pred_region
      %s174 = ssub.s32 %s10, 1
    $region12: #{emotion_classifier_forward.14} parent=5 // pred_fallthru
      _
    %p175 = scmp.lt.s32.totalorder %s10, 4
    // Predicated region
    $region13: #{emotion_classifier_forward.14} parent=5 // pred_check
      %p176 = pneg %p175
    $region14: #{emotion_classifier_forward.14} parent=5 // pred_check_branch
      %178 = sbr.rel (%p176) target = $region16
    $region15: #{emotion_classifier_forward.14} parent=5 // pred_region
      // Predicated region
      $region17: #{emotion_classifier_forward.14} parent=15 // pred_check
        %p179 = pneg %p44
      $region18: #{emotion_classifier_forward.14} parent=15 // pred_check_branch
        %181 = sbr.rel (%p179) target = $region20
      $region19: #{emotion_classifier_forward.14} parent=15 // pred_region
        %p182 = scmp.lt.s32.totalorder %s17, 1
        %s183 = scalar_select %p182, %s17, 1
        %p184 = scmp.lt.s32.totalorder %s18, 1
        %s185 = scalar_select %p184, %s18, 1
        %s186 = smul.addr %s183, 2
        %s187 = sadd.s32 %s185, %s186
        %s188 = smul.addr %s187, 4
        %s189 = scalar_lea.vmem %s0, %s188
      $region20: #{emotion_classifier_forward.14} parent=15 // pred_fallthru
        _
      // Predicated region
      $region21: #{emotion_classifier_forward.14} parent=15 // pred_check
        %p190 = pneg %p72
      $region22: #{emotion_classifier_forward.14} parent=15 // pred_check_branch
        %192 = sbr.rel (%p190) target = $region24
      $region23: #{emotion_classifier_forward.14} parent=15 // pred_region
        %p193 = scmp.lt.s32.totalorder %s17, 1
        %s194 = scalar_select %p193, %s17, 1
        %p195 = scmp.lt.s32.totalorder %s18, 1
        %s196 = scalar_select %p195, %s18, 1
        %s197 = smul.addr %s194, 2
        %s198 = sadd.s32 %s196, %s197
        %s199 = smul.addr %s198, 4
        %s200 = scalar_lea.vmem %s1, %s199
      $region24: #{emotion_classifier_forward.14} parent=15 // pred_fallthru
        _
      // Predicated region
      $region25: #{emotion_classifier_forward.14} parent=15 // pred_check
        %p201 = pneg %p100
      $region26: #{emotion_classifier_forward.14} parent=15 // pred_check_branch
        %203 = sbr.rel (%p201) target = $region28
      $region27: #{emotion_classifier_forward.14} parent=15 // pred_region
        %p204 = scmp.lt.s32.totalorder %s17, 1
        %s205 = scalar_select %p204, %s17, 1
        %p206 = scmp.lt.s32.totalorder %s18, 1
        %s207 = scalar_select %p206, %s18, 1
        %s208 = smul.addr %s205, 2
        %s209 = sadd.s32 %s207, %s208
        %s210 = smul.addr %s209, 4
        %s211 = scalar_lea.vmem %s2, %s210
      $region28: #{emotion_classifier_forward.14} parent=15 // pred_fallthru
        _
      // Predicated region
      $region29: #{emotion_classifier_forward.14} parent=15 // pred_check
        %p212 = pneg %p126
      $region30: #{emotion_classifier_forward.14} parent=15 // pred_check_branch
        %214 = sbr.rel (%p212) target = $region32
      $region31: #{emotion_classifier_forward.14} parent=15 // pred_region
        %p215 = scmp.lt.s32.totalorder %s17, 1
        %s216 = scalar_select %p215, %s17, 1
        %s217 = scalar_lea.vmem %s3, %s216
      $region32: #{emotion_classifier_forward.14} parent=15 // pred_fallthru
        _
    $region16: #{emotion_classifier_forward.14} parent=5 // pred_fallthru
      _
    %p218 = scmp.le.s32.totalorder 1, %s10
    %p219 = scmp.lt.s32.totalorder %s10, 5
    %p220 = pnand %p218, %p219
    %p221 = pneg %p220
    // Predicated region
    $region33: #{emotion_classifier_forward.14} parent=5 // pred_check
      _
    $region34: #{emotion_classifier_forward.14} parent=5 // pred_check_branch
      %223 = sbr.rel (%p220) target = $region36
    $region35: #{emotion_classifier_forward.14} parent=5 // pred_region
      %s224 = ssub.s32 %s10, 1
      %p225 = scmp.lt.s32.totalorder %s19, 1
      %s226 = scalar_select %p225, %s19, 1
      %p227 = scmp.lt.s32.totalorder %s20, 1
      %s228 = scalar_select %p227, %s20, 1
      %s229 = smul.addr %s226, 2
      %s230 = sadd.s32 %s228, %s229
      %s231 = smul.addr %s230, 4
      %s232 = scalar_lea.vmem %s0, %s231
      %p233 = pneg %p50
      %p234 = pneg %p47
      %p235 = scmp.lt.s32.totalorder %s19, 1
      %s236 = scalar_select %p235, %s19, 1
      %p237 = scmp.lt.s32.totalorder %s20, 1
      %s238 = scalar_select %p237, %s20, 1
      %s239 = smul.addr %s236, 2
      %s240 = sadd.s32 %s238, %s239
      %s241 = smul.addr %s240, 4
      %s242 = scalar_lea.vmem %s1, %s241
      %p243 = pneg %p78
      %p244 = pneg %p75
      %p245 = scmp.lt.s32.totalorder %s19, 1
      %s246 = scalar_select %p245, %s19, 1
      %p247 = scmp.lt.s32.totalorder %s20, 1
      %s248 = scalar_select %p247, %s20, 1
      %s249 = smul.addr %s246, 2
      %s250 = sadd.s32 %s248, %s249
      %s251 = smul.addr %s250, 4
      %s252 = scalar_lea.vmem %s2, %s251
      %p253 = pneg %p106
      %p254 = pneg %p103
      %p255 = scmp.lt.s32.totalorder %s19, 1
      %s256 = scalar_select %p255, %s19, 1
      %s257 = scalar_lea.vmem %s3, %s256
      %p258 = pneg %p132
      %p259 = pneg %p129
      %p260 = pneg %p160
      %p261 = pneg %p157
      %p262 = scmp.lt.s32.totalorder %s19, 1
      %s263 = scalar_select %p262, %s19, 1
      %p264 = scmp.lt.s32.totalorder %s20, 1
      %s265 = scalar_select %p264, %s20, 1
      %s266 = smul.addr %s263, 2
      %s267 = sadd.s32 %s265, %s266
      %s268 = smul.addr %s267, 4
      %s269 = scalar_lea.vmem %s4, %s268
      %p270 = scmp.lt.s32.totalorder %s19, 1
      %s271 = scalar_select %p270, %s19, 1
      %p272 = scmp.lt.s32.totalorder %s20, 1
      %s273 = scalar_select %p272, %s20, 1
      %s274 = smul.addr %s271, 2
      %s275 = sadd.s32 %s273, %s274
      %s276 = smul.addr %s275, 4
      %s277 = scalar_lea.vmem %s0, %s276
      %p278 = scmp.lt.s32.totalorder %s19, 1
      %s279 = scalar_select %p278, %s19, 1
      %p280 = scmp.lt.s32.totalorder %s20, 1
      %s281 = scalar_select %p280, %s20, 1
      %s282 = smul.addr %s279, 2
      %s283 = sadd.s32 %s281, %s282
      %s284 = smul.addr %s283, 4
      %s285 = scalar_lea.vmem %s1, %s284
      %p286 = scmp.lt.s32.totalorder %s19, 1
      %s287 = scalar_select %p286, %s19, 1
      %p288 = scmp.lt.s32.totalorder %s20, 1
      %s289 = scalar_select %p288, %s20, 1
      %s290 = smul.addr %s287, 2
      %s291 = sadd.s32 %s289, %s290
      %s292 = smul.addr %s291, 4
      %s293 = scalar_lea.vmem %s2, %s292
      %p294 = scmp.lt.s32.totalorder %s19, 1
      %s295 = scalar_select %p294, %s19, 1
      %s296 = scalar_lea.vmem %s3, %s295
      %p297 = scmp.lt.s32.totalorder %s19, 1
      %s298 = scalar_select %p297, %s19, 1
      %p299 = scmp.lt.s32.totalorder %s20, 1
      %s300 = scalar_select %p299, %s20, 1
      %s301 = smul.addr %s298, 2
      %s302 = sadd.s32 %s300, %s301
      %s303 = smul.addr %s302, 4
      %s304 = scalar_lea.vmem %s4, %s303
      %v306 = vld [vmem:[%s277] sm:$0xf]
      %v307 = vld [vmem:[%s285] sm:$0xf]
      %v308 = vld [vmem:[%s293] sm:$0xf]
      %v309 = vld [vmem:[%s296] sm:$0x1]
      %v311 = vperm.slane %v309, 0
      %vm313 = vcmask 130048
      %v315 = vsel %vm313, %v306, 0
      %v318 = vsel %vm313, %v307, 0
      %320 = vmatpush.bf16.xpose.msra.mxu0 0
      %321 = vmatpush.bf16.xpose.msra.mxu0 0
      %322 = vmatpush.bf16.xpose.msra.mxu0 0
      %323 = vmatpush.bf16.xpose.msra.mxu0 0
      %324 = vmatpush.bf16.xpose.msra.mxu0 0
      %325 = vmatpush.bf16.xpose.msra.mxu0 0
      %326 = vmatpush.bf16.xpose.msra.mxu0 0
      %327 = vmatpush.bf16.xpose.msra.mxu0 %v318
      %328 = vmatmul.bf16.gmra.mxu0 %v315
      %v329 = vpop.f32.mrf.mxu0
      %v330 = vadd.f32 %v311, %v329
      %v331 = vpop.f32.mrf.mxu0
      %332 = vdwg.mxu0
      %vm333 = vcmask 64512
      %v334 = vsel %vm333, %v330, -inf
      %335 = vmax.xlane.f32.xlu0 %v334
      %v336 = vpop.xlane.xlu0 %335
      %v337 = vsub.f32 %v330, %v336
      %v338 = vmul.f32 %v337, 1.442695
      %v339 = vpow.pop %v338
      %v340 = vsel %vm333, %v339, 0.0
      %341 = vadd.xlane.f32.xlu0 %v340
      %v342 = vpop.xlane.xlu0 %341
      %v343 = vrcp.pop %v342
      %v344 = vmul.f32 %v339, %v343
      %v345 = vpack.c.bf16 %v344, %v344
      %v347 = vsel %vm333, %v345, 0
      %vm349 = vcmask 1043456
      %v351 = vsel %vm349, %v308, 0
      %353 = vmatpush.bf16.msra.mxu0 0
      %354 = vmatpush.bf16.msra.mxu0 0
      %355 = vmatpush.bf16.msra.mxu0 0
      %356 = vmatpush.bf16.msra.mxu0 0
      %357 = vmatpush.bf16.msra.mxu0 0
      %358 = vmatpush.bf16.msra.mxu0 0
      %359 = vmatpush.bf16.msra.mxu0 0
      %360 = vmatpush.bf16.msra.mxu0 %v351
      %361 = vmatmul.bf16.gmra.mxu0 %v347
      %v362 = vpop.f32.mrf.mxu0
      %v363 = vadd.f32 0.0, %v362
      %v364 = vpop.f32.mrf.mxu0
      %365 = vdwg.mxu0
      %v366 = vpack.c.bf16 %v363, %v363
      %vm367 = vcmask 125952
      %368 = vst.msk [vmem:[%s304] sm:$0xf] %vm367, %v366
      %p369 = scmp.lt.s32.totalorder %s19, 1
      %s370 = scalar_select %p369, %s19, 1
      %p371 = scmp.lt.s32.totalorder %s20, 1
      %s372 = scalar_select %p371, %s20, 1
      %s373 = smul.addr %s370, 2
      %s374 = sadd.s32 %s372, %s373
      %s375 = smul.addr %s374, 4
      %s376 = scalar_lea.vmem %s4, %s375
      // Predicated region
      $region37: #{emotion_classifier_forward.14} parent=35 // pred_check
        %p377 = pneg %p157
      $region38: #{emotion_classifier_forward.14} parent=35 // pred_check_branch
        %379 = sbr.rel (%p377) target = $region40
      $region39: #{emotion_classifier_forward.14} parent=35 // pred_region
        _
      $region40: #{emotion_classifier_forward.14} parent=35 // pred_fallthru
        _
    $region36: #{emotion_classifier_forward.14} parent=5 // pred_fallthru
      _
    %p380 = scmp.le.s32.totalorder 2, %s10
    // Predicated region
    $region41: #{emotion_classifier_forward.14} parent=5 // pred_check
      %p381 = pneg %p380
    $region42: #{emotion_classifier_forward.14} parent=5 // pred_check_branch
      %383 = sbr.rel (%p381) target = $region44
    $region43: #{emotion_classifier_forward.14} parent=5 // pred_region
      %s384 = ssub.s32 %s10, 2
      // Predicated region
      $region45: #{emotion_classifier_forward.14} parent=43 // pred_check
        %p385 = pneg %p163
      $region46: #{emotion_classifier_forward.14} parent=43 // pred_check_branch
        %387 = sbr.rel (%p385) target = $region48
      $region47: #{emotion_classifier_forward.14} parent=43 // pred_region
        %p388 = scmp.lt.s32.totalorder %s21, 1
        %s389 = scalar_select %p388, %s21, 1
        %p390 = scmp.lt.s32.totalorder %s22, 1
        %s391 = scalar_select %p390, %s22, 1
        %s392 = smul.addr %s389, 2
        %s393 = sadd.s32 %s391, %s392
        %s394 = smul.addr %s393, 4
        %s395 = scalar_lea.vmem %s4, %s394
      $region48: #{emotion_classifier_forward.14} parent=43 // pred_fallthru
        _
    $region44: #{emotion_classifier_forward.14} parent=5 // pred_fallthru
      _
  $region6: #{emotion_classifier_forward.14} parent=0 // loop_footer
    %s14 = sadd.s32 1, %s10
  $region7: #{emotion_classifier_forward.14} parent=0 // loop_footer_branch
    %9 = sbr.rel target = $region3
  $region8: #{emotion_classifier_forward.14} parent=0 // loop_exit
    _

// kernel: emotion_classifier_forward.13
$region0: #{emotion_classifier_forward.13}
  #allocation0 [shape = 'u32[]', space=smem, size = 0x4, offset = 0x4, fixed_abs, tag = 'smem constant byte address 0x4 - core index']
  #allocation1 [shape = 'u32[72,128]{1,0:T(1,128)}', space=vmem, size = 0x9000, scoped, tag = 'internal scratch']
  %s0 = inlined_call_operand.vmem [shape: bf16[16,32], index: 0, kind: input, shape index: {}]
  %s1 = inlined_call_operand.vmem [shape: bf16[32,96], index: 1, kind: input, shape index: {}]
  %s2 = inlined_call_operand.vmem [shape: f32[1,96], index: 2, kind: input, shape index: {}]
  %s3 = inlined_call_operand.vmem [shape: bf16[16,96], index: 3, kind: output, shape index: {}]
  %s4 = sld [smem:[#allocation0]]
  $region22: #{emotion_classifier_forward.13} parent=0
    _
  %s6 = ssub.s32 1, %s4
  %s7 = scalar_select 0, %s6, %s4
  // Predicated region
  $region2: #{emotion_classifier_forward.13} parent=0 // pred_check
    _
  $region3: #{emotion_classifier_forward.13} parent=0 // pred_check_branch
    %9 = sbr.rel (0) target = $region5
  $region4: #{emotion_classifier_forward.13} parent=0 // pred_region
    _
  $region5: #{emotion_classifier_forward.13} parent=0 // pred_fallthru
    _
  // Predicated region
  $region6: #{emotion_classifier_forward.13} parent=0 // pred_check
    _
  $region7: #{emotion_classifier_forward.13} parent=0 // pred_check_branch
    %11 = sbr.rel (0) target = $region9
  $region8: #{emotion_classifier_forward.13} parent=0 // pred_region
    _
  $region9: #{emotion_classifier_forward.13} parent=0 // pred_fallthru
    _
  // Predicated region
  $region10: #{emotion_classifier_forward.13} parent=0 // pred_check
    _
  $region11: #{emotion_classifier_forward.13} parent=0 // pred_check_branch
    %13 = sbr.rel (0) target = $region13
  $region12: #{emotion_classifier_forward.13} parent=0 // pred_region
    _
  $region13: #{emotion_classifier_forward.13} parent=0 // pred_fallthru
    _
  %v15 = vld [vmem:[%s0] sm:$0xf]
  %v16 = vld [vmem:[%s0 + $0x4] sm:$0xf]
  %v17 = vld [vmem:[%s1] sm:$0xf]
  %v18 = vld [vmem:[%s1 + $0x4] sm:$0xf]
  %v19 = vld [vmem:[%s1 + $0x8] sm:$0xf]
  %v20 = vld [vmem:[%s1 + $0xc] sm:$0xf]
  %v21 = vld [vmem:[%s2] sm:$0x1]
  %v23 = vperm.slane %v21, 0
  %v27 = vunpack.c.l.b16 %v15
  %v28 = vunpack.c.l.b16 %v16
  %v29 = vpack.c.b16 %v28, %v27
  %v34 = vunpack.c.l.b16 %v17
  %v35 = vunpack.c.l.b16 %v18
  %v36 = vunpack.c.l.b16 %v19
  %v37 = vunpack.c.l.b16 %v20
  %v38 = vpack.c.b16 %v35, %v34
  %v39 = vpack.c.b16 %v37, %v36
  %vm42 = vcmask 261120
  %v44 = vsel %vm42, %v29, 0
  %46 = vmatpush.bf16.msra.mxu0 0
  %47 = vmatpush.bf16.msra.mxu0 0
  %48 = vmatpush.bf16.msra.mxu0 0
  %49 = vmatpush.bf16.msra.mxu0 0
  %50 = vmatpush.bf16.msra.mxu0 0
  %51 = vmatpush.bf16.msra.mxu0 0
  %52 = vmatpush.bf16.msra.mxu0 %v39
  %53 = vmatpush.bf16.msra.mxu0 %v38
  %54 = vmatmul.bf16.gmra.mxu0 %v44
  %v55 = vpop.f32.mrf.mxu0
  %v56 = vadd.f32 %v23, %v55
  %v57 = vpop.f32.mrf.mxu0
  %v58 = vadd.f32 %v23, %v57
  %59 = vdwg.mxu0
  %v60 = vpack.c.bf16 %v56, %v56
  %v61 = vpack.c.bf16 %v58, %v58
  %vm62 = vcmask 781312
  %63 = vst.msk [vmem:[%s3] sm:$0xf] %vm62, %v60
  %64 = vst.msk [vmem:[%s3 + $0x4] sm:$0xf] %vm62, %v61
  // Predicated region
  $region14: #{emotion_classifier_forward.13} parent=0 // pred_check
    _
  $region15: #{emotion_classifier_forward.13} parent=0 // pred_check_branch
    %66 = sbr.rel (0) target = $region17
  $region16: #{emotion_classifier_forward.13} parent=0 // pred_region
    _
  $region17: #{emotion_classifier_forward.13} parent=0 // pred_fallthru
    _
  // Predicated region
  $region18: #{emotion_classifier_forward.13} parent=0 // pred_check
    _
  $region19: #{emotion_classifier_forward.13} parent=0 // pred_check_branch
    %68 = sbr.rel (0) target = $region21
  $region20: #{emotion_classifier_forward.13} parent=0 // pred_region
    _
  $region21: #{emotion_classifier_forward.13} parent=0 // pred_fallthru
    _

// kernel: emotion_classifier_forward.15
$region0: #{emotion_classifier_forward.15}
  #allocation0 [shape = 'u32[]', space=smem, size = 0x4, offset = 0x4, fixed_abs, tag = 'smem constant byte address 0x4 - core index']
  #allocation1 [shape = 'u32[72,128]{1,0:T(1,128)}', space=vmem, size = 0x9000, scoped, tag = 'internal scratch']
  %s0 = inlined_call_operand.vmem [shape: bf16[16,32], index: 0, kind: input, shape index: {}]
  %s1 = inlined_call_operand.vmem [shape: bf16[32,32], index: 1, kind: input, shape index: {}]
  %s2 = inlined_call_operand.vmem [shape: f32[1,32], index: 2, kind: input, shape index: {}]
  %s3 = inlined_call_operand.vmem [shape: bf16[16,32], index: 3, kind: input, shape index: {}]
  %s4 = inlined_call_operand.vmem [shape: f32[1,32], index: 4, kind: input, shape index: {}]
  %s5 = inlined_call_operand.vmem [shape: f32[1,32], index: 5, kind: input, shape index: {}]
  %s6 = inlined_call_operand.vmem [shape: bf16[16,32], index: 6, kind: output, shape index: {}]
  %s7 = sld [smem:[#allocation0]]
  $region34: #{emotion_classifier_forward.15} parent=0
    _
  %s9 = ssub.s32 1, %s7
  %s10 = scalar_select 0, %s9, %s7
  // Predicated region
  $region2: #{emotion_classifier_forward.15} parent=0 // pred_check
    _
  $region3: #{emotion_classifier_forward.15} parent=0 // pred_check_branch
    %12 = sbr.rel (0) target = $region5
  $region4: #{emotion_classifier_forward.15} parent=0 // pred_region
    _
  $region5: #{emotion_classifier_forward.15} parent=0 // pred_fallthru
    _
  // Predicated region
  $region6: #{emotion_classifier_forward.15} parent=0 // pred_check
    _
  $region7: #{emotion_classifier_forward.15} parent=0 // pred_check_branch
    %14 = sbr.rel (0) target = $region9
  $region8: #{emotion_classifier_forward.15} parent=0 // pred_region
    _
  $region9: #{emotion_classifier_forward.15} parent=0 // pred_fallthru
    _
  // Predicated region
  $region10: #{emotion_classifier_forward.15} parent=0 // pred_check
    _
  $region11: #{emotion_classifier_forward.15} parent=0 // pred_check_branch
    %16 = sbr.rel (0) target = $region13
  $region12: #{emotion_classifier_forward.15} parent=0 // pred_region
    _
  $region13: #{emotion_classifier_forward.15} parent=0 // pred_fallthru
    _
  // Predicated region
  $region14: #{emotion_classifier_forward.15} parent=0 // pred_check
    _
  $region15: #{emotion_classifier_forward.15} parent=0 // pred_check_branch
    %18 = sbr.rel (0) target = $region17
  $region16: #{emotion_classifier_forward.15} parent=0 // pred_region
    _
  $region17: #{emotion_classifier_forward.15} parent=0 // pred_fallthru
    _
  // Predicated region
  $region18: #{emotion_classifier_forward.15} parent=0 // pred_check
    _
  $region19: #{emotion_classifier_forward.15} parent=0 // pred_check_branch
    %20 = sbr.rel (0) target = $region21
  $region20: #{emotion_classifier_forward.15} parent=0 // pred_region
    _
  $region21: #{emotion_classifier_forward.15} parent=0 // pred_fallthru
    _
  // Predicated region
  $region22: #{emotion_classifier_forward.15} parent=0 // pred_check
    _
  $region23: #{emotion_classifier_forward.15} parent=0 // pred_check_branch
    %22 = sbr.rel (0) target = $region25
  $region24: #{emotion_classifier_forward.15} parent=0 // pred_region
    _
  $region25: #{emotion_classifier_forward.15} parent=0 // pred_fallthru
    _
  %v24 = vld [vmem:[%s0] sm:$0xf]
  %v25 = vld [vmem:[%s0 + $0x4] sm:$0xf]
  %v26 = vld [vmem:[%s1] sm:$0xf]
  %v27 = vld [vmem:[%s1 + $0x4] sm:$0xf]
  %v28 = vld [vmem:[%s1 + $0x8] sm:$0xf]
  %v29 = vld [vmem:[%s1 + $0xc] sm:$0xf]
  %v30 = vld [vmem:[%s2] sm:$0x1]
  %v32 = vperm.slane %v30, 0
  %v36 = vunpack.c.l.b16 %v24
  %v37 = vunpack.c.l.b16 %v25
  %v38 = vpack.c.b16 %v37, %v36
  %v43 = vunpack.c.l.b16 %v26
  %v44 = vunpack.c.l.b16 %v27
  %v45 = vunpack.c.l.b16 %v28
  %v46 = vunpack.c.l.b16 %v29
  %v47 = vpack.c.b16 %v44, %v43
  %v48 = vpack.c.b16 %v46, %v45
  %vm51 = vcmask 261120
  %v53 = vsel %vm51, %v38, 0
  %55 = vmatpush.bf16.msra.mxu0 0
  %56 = vmatpush.bf16.msra.mxu0 0
  %57 = vmatpush.bf16.msra.mxu0 0
  %58 = vmatpush.bf16.msra.mxu0 0
  %59 = vmatpush.bf16.msra.mxu0 0
  %60 = vmatpush.bf16.msra.mxu0 0
  %61 = vmatpush.bf16.msra.mxu0 %v48
  %62 = vmatpush.bf16.msra.mxu0 %v47
  %63 = vmatmul.bf16.gmra.mxu0 %v53
  %v64 = vpop.f32.mrf.mxu0
  %v65 = vadd.f32 %v32, %v64
  %v66 = vpop.f32.mrf.mxu0
  %v67 = vadd.f32 %v32, %v66
  %68 = vdwg.mxu0
  %v69 = vld [vmem:[%s3] sm:$0xf]
  %v70 = vld [vmem:[%s3 + $0x4] sm:$0xf]
  %v71 = vunpack.c.l.bf16 %v69
  %v72 = vunpack.c.l.bf16 %v70
  %v73 = vadd.f32 %v65, %v71
  %v74 = vadd.f32 %v67, %v72
  %v75 = vsel %vm51, %v73, 0.0
  %76 = vadd.xlane.f32.xlu0 %v75
  %v77 = vpop.xlane.xlu0 %76
  %v78 = vsel %vm51, %v74, 0.0
  %79 = vadd.xlane.f32.xlu0 %v78
  %v80 = vpop.xlane.xlu0 %79
  %v81 = vrcp.pop 32.0
  %v82 = vmul.f32 32.0, %v81
  %v83 = vsub.f32 1.0, %v82
  %v84 = vmul.f32 %v81, %v83
  %v85 = vadd.f32 %v81, %v84
  %vm86 = vweird.f32 %v81
  %v87 = vsel %vm86, %v81, %v85
  %v88 = vmul.f32 %v77, %v87
  %v89 = vmul.f32 %v80, %v87
  %v90 = vsub.f32 %v73, %v88
  %v91 = vsub.f32 %v74, %v89
  %v92 = vmul.f32 %v90, %v90
  %v93 = vmul.f32 %v91, %v91
  %v94 = vsel %vm51, %v92, 0.0
  %95 = vadd.xlane.f32.xlu0 %v94
  %v96 = vpop.xlane.xlu0 %95
  %v97 = vsel %vm51, %v93, 0.0
  %98 = vadd.xlane.f32.xlu0 %v97
  %v99 = vpop.xlane.xlu0 %98
  %v100 = vmul.f32 %v96, %v87
  %v101 = vmul.f32 %v99, %v87
  %v102 = vadd.f32 %v100, 1e-12
  %v103 = vadd.f32 %v101, 1e-12
  %v104 = vrsqrt.pop %v102
  %v105 = vmul.f32 %v104, %v102
  %v106 = vmul.f32 %v105, %v104
  %v107 = vmul.f32 0.5, %v106
  %v108 = vsub.f32 1.5, %v107
  %v109 = vmul.f32 %v104, %v108
  %vm110 = vweird.f32 %v102
  %vm111 = vweird.f32 %v104
  %vm112 = vmor %vm110, %vm111
  %v113 = vsel %vm112, %v104, %v109
  %v114 = vrsqrt.pop %v103
  %v115 = vmul.f32 %v114, %v103
  %v116 = vmul.f32 %v115, %v114
  %v117 = vmul.f32 0.5, %v116
  %v118 = vsub.f32 1.5, %v117
  %v119 = vmul.f32 %v114, %v118
  %vm120 = vweird.f32 %v103
  %vm121 = vweird.f32 %v114
  %vm122 = vmor %vm120, %vm121
  %v123 = vsel %vm122, %v114, %v119
  %v124 = vmul.f32 %v90, %v113
  %v125 = vmul.f32 %v91, %v123
  %v126 = vld [vmem:[%s4] sm:$0x1]
  %v128 = vperm.slane %v126, 0
  %v130 = vmul.f32 %v124, %v128
  %v131 = vmul.f32 %v125, %v128
  %v132 = vld [vmem:[%s5] sm:$0x1]
  %v134 = vperm.slane %v132, 0
  %v136 = vadd.f32 %v130, %v134
  %v137 = vadd.f32 %v131, %v134
  %v138 = vpack.c.bf16 %v136, %v136
  %v139 = vpack.c.bf16 %v137, %v137
  %vm140 = vcmask 257024
  %141 = vst.msk [vmem:[%s6] sm:$0xf] %vm140, %v138
  %142 = vst.msk [vmem:[%s6 + $0x4] sm:$0xf] %vm140, %v139
  // Predicated region
  $region26: #{emotion_classifier_forward.15} parent=0 // pred_check
    _
  $region27: #{emotion_classifier_forward.15} parent=0 // pred_check_branch
    %144 = sbr.rel (0) target = $region29
  $region28: #{emotion_classifier_forward.15} parent=0 // pred_region
    _
  $region29: #{emotion_classifier_forward.15} parent=0 // pred_fallthru
    _
  // Predicated region
  $region30: #{emotion_classifier_forward.15} parent=0 // pred_check
    _
  $region31: #{emotion_classifier_forward.15} parent=0 // pred_check_branch
    %146 = sbr.rel (0) target = $region33
  $region32: #{emotion_classifier_forward.15} parent=0 // pred_region
    _
  $region33: #{emotion_classifier_forward.15} parent=0 // pred_fallthru
    _

// kernel: emotion_classifier_forward.16
$region0: #{emotion_classifier_forward.16}
  #allocation0 [shape = 'u32[]', space=smem, size = 0x4, offset = 0x4, fixed_abs, tag = 'smem constant byte address 0x4 - core index']
  #allocation1 [shape = 'u32[72,128]{1,0:T(1,128)}', space=vmem, size = 0x9000, scoped, tag = 'internal scratch']
  %s0 = inlined_call_operand.vmem [shape: bf16[16,32], index: 0, kind: input, shape index: {}]
  %s1 = inlined_call_operand.vmem [shape: bf16[32,64], index: 1, kind: input, shape index: {}]
  %s2 = inlined_call_operand.vmem [shape: f32[1,64], index: 2, kind: input, shape index: {}]
  %s3 = inlined_call_operand.vmem [shape: bf16[16,64], index: 3, kind: output, shape index: {}]
  %s4 = sld [smem:[#allocation0]]
  $region22: #{emotion_classifier_forward.16} parent=0
    _
  %s6 = ssub.s32 1, %s4
  %s7 = scalar_select 0, %s6, %s4
  // Predicated region
  $region2: #{emotion_classifier_forward.16} parent=0 // pred_check
    _
  $region3: #{emotion_classifier_forward.16} parent=0 // pred_check_branch
    %9 = sbr.rel (0) target = $region5
  $region4: #{emotion_classifier_forward.16} parent=0 // pred_region
    _
  $region5: #{emotion_classifier_forward.16} parent=0 // pred_fallthru
    _
  // Predicated region
  $region6: #{emotion_classifier_forward.16} parent=0 // pred_check
    _
  $region7: #{emotion_classifier_forward.16} parent=0 // pred_check_branch
    %11 = sbr.rel (0) target = $region9
  $region8: #{emotion_classifier_forward.16} parent=0 // pred_region
    _
  $region9: #{emotion_classifier_forward.16} parent=0 // pred_fallthru
    _
  // Predicated region
  $region10: #{emotion_classifier_forward.16} parent=0 // pred_check
    _
  $region11: #{emotion_classifier_forward.16} parent=0 // pred_check_branch
    %13 = sbr.rel (0) target = $region13
  $region12: #{emotion_classifier_forward.16} parent=0 // pred_region
    _
  $region13: #{emotion_classifier_forward.16} parent=0 // pred_fallthru
    _
  %v15 = vld [vmem:[%s0] sm:$0xf]
  %v16 = vld [vmem:[%s0 + $0x4] sm:$0xf]
  %v17 = vld [vmem:[%s1] sm:$0xf]
  %v18 = vld [vmem:[%s1 + $0x4] sm:$0xf]
  %v19 = vld [vmem:[%s1 + $0x8] sm:$0xf]
  %v20 = vld [vmem:[%s1 + $0xc] sm:$0xf]
  %v21 = vld [vmem:[%s2] sm:$0x1]
  %v23 = vperm.slane %v21, 0
  %v27 = vunpack.c.l.b16 %v15
  %v28 = vunpack.c.l.b16 %v16
  %v29 = vpack.c.b16 %v28, %v27
  %v34 = vunpack.c.l.b16 %v17
  %v35 = vunpack.c.l.b16 %v18
  %v36 = vunpack.c.l.b16 %v19
  %v37 = vunpack.c.l.b16 %v20
  %v38 = vpack.c.b16 %v35, %v34
  %v39 = vpack.c.b16 %v37, %v36
  %vm42 = vcmask 261120
  %v44 = vsel %vm42, %v29, 0
  %46 = vmatpush.bf16.msra.mxu0 0
  %47 = vmatpush.bf16.msra.mxu0 0
  %48 = vmatpush.bf16.msra.mxu0 0
  %49 = vmatpush.bf16.msra.mxu0 0
  %50 = vmatpush.bf16.msra.mxu0 0
  %51 = vmatpush.bf16.msra.mxu0 0
  %52 = vmatpush.bf16.msra.mxu0 %v39
  %53 = vmatpush.bf16.msra.mxu0 %v38
  %54 = vmatmul.bf16.gmra.mxu0 %v44
  %v55 = vpop.f32.mrf.mxu0
  %v56 = vadd.f32 %v23, %v55
  %v57 = vpop.f32.mrf.mxu0
  %v58 = vadd.f32 %v23, %v57
  %59 = vdwg.mxu0
  %v60 = vmul.f32 %v56, 0.5
  %v61 = vmul.f32 %v58, 0.5
  %v62 = vmul.f32 %v56, 0.044715
  %v63 = vmul.f32 %v58, 0.044715
  %v64 = vmul.f32 %v62, %v56
  %v65 = vmul.f32 %v63, %v58
  %v66 = vmul.f32 %v64, %v56
  %v67 = vmul.f32 %v65, %v58
  %v68 = vadd.f32 %v56, %v66
  %v69 = vadd.f32 %v58, %v67
  %v70 = vmul.f32 %v68, 0.7978846
  %v71 = vmul.f32 %v69, 0.7978846
  %v72 = vtanh.pop %v70
  %v73 = vtanh.pop %v71
  %v74 = vadd.f32 %v72, 1.0
  %v75 = vadd.f32 %v73, 1.0
  %v76 = vmul.f32 %v60, %v74
  %v77 = vmul.f32 %v61, %v75
  %v78 = vpack.c.bf16 %v76, %v76
  %v79 = vpack.c.bf16 %v77, %v77
  %vm80 = vcmask 519168
  %81 = vst.msk [vmem:[%s3] sm:$0xf] %vm80, %v78
  %82 = vst.msk [vmem:[%s3 + $0x4] sm:$0xf] %vm80, %v79
  // Predicated region
  $region14: #{emotion_classifier_forward.16} parent=0 // pred_check
    _
  $region15: #{emotion_classifier_forward.16} parent=0 // pred_check_branch
    %84 = sbr.rel (0) target = $region17
  $region16: #{emotion_classifier_forward.16} parent=0 // pred_region
    _
  $region17: #{emotion_classifier_forward.16} parent=0 // pred_fallthru
    _
  // Predicated region
  $region18: #{emotion_classifier_forward.16} parent=0 // pred_check
    _
  $region19: #{emotion_classifier_forward.16} parent=0 // pred_check_branch
    %86 = sbr.rel (0) target = $region21
  $region20: #{emotion_classifier_forward.16} parent=0 // pred_region
    _
  $region21: #{emotion_classifier_forward.16} parent=0 // pred_fallthru
    _

// kernel: emotion_classifier_forward.23
$region0: #{emotion_classifier_forward.23}
  #allocation0 [shape = 'u32[]', space=smem, size = 0x4, offset = 0x4, fixed_abs, tag = 'smem constant byte address 0x4 - core index']
  #allocation1 [shape = 'u32[72,128]{1,0:T(1,128)}', space=vmem, size = 0x9000, scoped, tag = 'internal scratch']
  %s0 = inlined_call_operand.vmem [shape: bf16[2,32], index: 0, kind: input, shape index: {}]
  %s1 = inlined_call_operand.vmem [shape: bf16[32,32], index: 1, kind: input, shape index: {}]
  %s2 = inlined_call_operand.vmem [shape: f32[1,32], index: 2, kind: input, shape index: {}]
  %s3 = inlined_call_operand.vmem [shape: bf16[32,128], index: 3, kind: input, shape index: {}]
  %s4 = inlined_call_operand.vmem [shape: f32[1,128], index: 4, kind: input, shape index: {}]
  %s5 = inlined_call_operand.hbm [shape: f32[2,128], index: 5, kind: output, shape index: {}]
  %s6 = sld [smem:[#allocation0]]
  $region30: #{emotion_classifier_forward.23} parent=0
    _
  %s8 = ssub.s32 1, %s6
  %s9 = scalar_select 0, %s8, %s6
  $region1: #{emotion_classifier_forward.23} parent=0
    #allocation2 [shape = 'u8[1024]{0}', space=vmem, size = 0x400, scoped, tag = 'output window, operand 0, single buffered']
    #allocation3 [shape = 's32[1]{0}', space=sflag, size = 0x4, scoped, tag = 'scoped memory for emotion_classifier_forward.23']
    %10 = vsyncpa [#allocation3], 0
    // Predicated region
    $region2: #{emotion_classifier_forward.23} parent=1 // pred_check
      _
    $region3: #{emotion_classifier_forward.23} parent=1 // pred_check_branch
      %12 = sbr.rel (0) target = $region5
    $region4: #{emotion_classifier_forward.23} parent=1 // pred_region
      _
    $region5: #{emotion_classifier_forward.23} parent=1 // pred_fallthru
      _
    // Predicated region
    $region6: #{emotion_classifier_forward.23} parent=1 // pred_check
      _
    $region7: #{emotion_classifier_forward.23} parent=1 // pred_check_branch
      %14 = sbr.rel (0) target = $region9
    $region8: #{emotion_classifier_forward.23} parent=1 // pred_region
      _
    $region9: #{emotion_classifier_forward.23} parent=1 // pred_fallthru
      _
    // Predicated region
    $region10: #{emotion_classifier_forward.23} parent=1 // pred_check
      _
    $region11: #{emotion_classifier_forward.23} parent=1 // pred_check_branch
      %16 = sbr.rel (0) target = $region13
    $region12: #{emotion_classifier_forward.23} parent=1 // pred_region
      _
    $region13: #{emotion_classifier_forward.23} parent=1 // pred_fallthru
      _
    // Predicated region
    $region14: #{emotion_classifier_forward.23} parent=1 // pred_check
      _
    $region15: #{emotion_classifier_forward.23} parent=1 // pred_check_branch
      %18 = sbr.rel (0) target = $region17
    $region16: #{emotion_classifier_forward.23} parent=1 // pred_region
      _
    $region17: #{emotion_classifier_forward.23} parent=1 // pred_fallthru
      _
    // Predicated region
    $region18: #{emotion_classifier_forward.23} parent=1 // pred_check
      _
    $region19: #{emotion_classifier_forward.23} parent=1 // pred_check_branch
      %20 = sbr.rel (0) target = $region21
    $region20: #{emotion_classifier_forward.23} parent=1 // pred_region
      _
    $region21: #{emotion_classifier_forward.23} parent=1 // pred_fallthru
      _
    %v22 = vld [vmem:[%s0] sm:$0x1]
    %v23 = vld [vmem:[%s1] sm:$0xf]
    %v24 = vld [vmem:[%s1 + $0x4] sm:$0xf]
    %v25 = vld [vmem:[%s1 + $0x8] sm:$0xf]
    %v26 = vld [vmem:[%s1 + $0xc] sm:$0xf]
    %v27 = vld [vmem:[%s2] sm:$0x1]
    %v29 = vperm.slane %v27, 0
    %v35 = vunpack.c.l.b16 %v23
    %v36 = vunpack.c.l.b16 %v24
    %v37 = vunpack.c.l.b16 %v25
    %v38 = vunpack.c.l.b16 %v26
    %v39 = vpack.c.b16 %v36, %v35
    %v40 = vpack.c.b16 %v38, %v37
    %vm43 = vcmask 261120
    %v45 = vsel %vm43, %v22, 0
    %47 = vmatpush.bf16.msra.mxu0 0
    %48 = vmatpush.bf16.msra.mxu0 0
    %49 = vmatpush.bf16.msra.mxu0 0
    %50 = vmatpush.bf16.msra.mxu0 0
    %51 = vmatpush.bf16.msra.mxu0 0
    %52 = vmatpush.bf16.msra.mxu0 0
    %53 = vmatpush.bf16.msra.mxu0 %v40
    %54 = vmatpush.bf16.msra.mxu0 %v39
    %55 = vmatmul.bf16.gmra.mxu0 %v45
    %v56 = vpop.f32.mrf.mxu0
    %v57 = vadd.f32 %v29, %v56
    %v58 = vpop.f32.mrf.mxu0
    %59 = vdwg.mxu0
    %v60 = vtanh.pop %v57
    %v61 = vpack.c.bf16 %v60, %v60
    %v62 = vld [vmem:[%s3] sm:$0xf]
    %v63 = vld [vmem:[%s3 + $0x4] sm:$0xf]
    %v64 = vld [vmem:[%s3 + $0x8] sm:$0xf]
    %v65 = vld [vmem:[%s3 + $0xc] sm:$0xf]
    %v66 = vld [vmem:[%s4] sm:$0x1]
    %v68 = vperm.slane %v66, 0
    %v74 = vunpack.c.l.b16 %v62
    %v75 = vunpack.c.l.b16 %v63
    %v76 = vunpack.c.l.b16 %v64
    %v77 = vunpack.c.l.b16 %v65
    %v78 = vpack.c.b16 %v75, %v74
    %v79 = vpack.c.b16 %v77, %v76
    %v83 = vsel %vm43, %v61, 0
    %85 = vmatpush.bf16.msra.mxu0 0
    %86 = vmatpush.bf16.msra.mxu0 0
    %87 = vmatpush.bf16.msra.mxu0 0
    %88 = vmatpush.bf16.msra.mxu0 0
    %89 = vmatpush.bf16.msra.mxu0 0
    %90 = vmatpush.bf16.msra.mxu0 0
    %91 = vmatpush.bf16.msra.mxu0 %v79
    %92 = vmatpush.bf16.msra.mxu0 %v78
    %93 = vmatmul.bf16.gmra.mxu0 %v83
    %v94 = vpop.f32.mrf.mxu0
    %v95 = vadd.f32 %v68, %v94
    %v96 = vpop.f32.mrf.mxu0
    %97 = vdwg.mxu0
    %98 = vst [vmem:[#allocation2] sm:$0x3] %v95
    // Predicated region
    $region22: #{emotion_classifier_forward.23} parent=1 // pred_check
      _
    $region23: #{emotion_classifier_forward.23} parent=1 // pred_check_branch
      %100 = sbr.rel (0) target = $region25
    $region24: #{emotion_classifier_forward.23} parent=1 // pred_region
      %102 = vsyncadd [#allocation3], 0
      %s104 = sshll.u32 [#allocation2], 4
      %s105 = int_to_ptr.vmem [resolvable:$true] %s104
      %s106 = sshll.u32 %s5, 4
      %s107 = int_to_ptr.hbm [resolvable:$true] %s106
      %109 = dma.vmem_to_hbm [thread:$0]  %s105, 32, %s107, [#allocation3]
    $region25: #{emotion_classifier_forward.23} parent=1 // pred_fallthru
      _
    // Predicated region
    $region26: #{emotion_classifier_forward.23} parent=1 // pred_check
      _
    $region27: #{emotion_classifier_forward.23} parent=1 // pred_check_branch
      %111 = sbr.rel (0) target = $region29
    $region28: #{emotion_classifier_forward.23} parent=1 // pred_region
      %113 = dma.done [#allocation3], 32
    $region29: #{emotion_classifier_forward.23} parent=1 // pred_fallthru
      _
    %114 = vsyncpa [#allocation3], 1

// kernel: emotion_classifier_forward.17
$region0: #{emotion_classifier_forward.17}
  #allocation0 [shape = 'u32[]', space=smem, size = 0x4, offset = 0x4, fixed_abs, tag = 'smem constant byte address 0x4 - core index']
  #allocation1 [shape = 'u32[72,128]{1,0:T(1,128)}', space=vmem, size = 0x9000, scoped, tag = 'internal scratch']
  %s0 = inlined_call_operand.vmem [shape: bf16[16,64], index: 0, kind: input, shape index: {}]
  %s1 = inlined_call_operand.vmem [shape: bf16[64,32], index: 1, kind: input, shape index: {}]
  %s2 = inlined_call_operand.vmem [shape: f32[1,32], index: 2, kind: input, shape index: {}]
  %s3 = inlined_call_operand.vmem [shape: bf16[16,32], index: 3, kind: input, shape index: {}]
  %s4 = inlined_call_operand.vmem [shape: f32[1,32], index: 4, kind: input, shape index: {}]
  %s5 = inlined_call_operand.vmem [shape: f32[1,32], index: 5, kind: input, shape index: {}]
  %s6 = inlined_call_operand.vmem [shape: bf16[16,32], index: 6, kind: output, shape index: {}]
  %s7 = sld [smem:[#allocation0]]
  $region34: #{emotion_classifier_forward.17} parent=0
    _
  %s9 = ssub.s32 1, %s7
  %s10 = scalar_select 0, %s9, %s7
  // Predicated region
  $region2: #{emotion_classifier_forward.17} parent=0 // pred_check
    _
  $region3: #{emotion_classifier_forward.17} parent=0 // pred_check_branch
    %12 = sbr.rel (0) target = $region5
  $region4: #{emotion_classifier_forward.17} parent=0 // pred_region
    _
  $region5: #{emotion_classifier_forward.17} parent=0 // pred_fallthru
    _
  // Predicated region
  $region6: #{emotion_classifier_forward.17} parent=0 // pred_check
    _
  $region7: #{emotion_classifier_forward.17} parent=0 // pred_check_branch
    %14 = sbr.rel (0) target = $region9
  $region8: #{emotion_classifier_forward.17} parent=0 // pred_region
    _
  $region9: #{emotion_classifier_forward.17} parent=0 // pred_fallthru
    _
  // Predicated region
  $region10: #{emotion_classifier_forward.17} parent=0 // pred_check
    _
  $region11: #{emotion_classifier_forward.17} parent=0 // pred_check_branch
    %16 = sbr.rel (0) target = $region13
  $region12: #{emotion_classifier_forward.17} parent=0 // pred_region
    _
  $region13: #{emotion_classifier_forward.17} parent=0 // pred_fallthru
    _
  // Predicated region
  $region14: #{emotion_classifier_forward.17} parent=0 // pred_check
    _
  $region15: #{emotion_classifier_forward.17} parent=0 // pred_check_branch
    %18 = sbr.rel (0) target = $region17
  $region16: #{emotion_classifier_forward.17} parent=0 // pred_region
    _
  $region17: #{emotion_classifier_forward.17} parent=0 // pred_fallthru
    _
  // Predicated region
  $region18: #{emotion_classifier_forward.17} parent=0 // pred_check
    _
  $region19: #{emotion_classifier_forward.17} parent=0 // pred_check_branch
    %20 = sbr.rel (0) target = $region21
  $region20: #{emotion_classifier_forward.17} parent=0 // pred_region
    _
  $region21: #{emotion_classifier_forward.17} parent=0 // pred_fallthru
    _
  // Predicated region
  $region22: #{emotion_classifier_forward.17} parent=0 // pred_check
    _
  $region23: #{emotion_classifier_forward.17} parent=0 // pred_check_branch
    %22 = sbr.rel (0) target = $region25
  $region24: #{emotion_classifier_forward.17} parent=0 // pred_region
    _
  $region25: #{emotion_classifier_forward.17} parent=0 // pred_fallthru
    _
  %v24 = vld [vmem:[%s0] sm:$0xf]
  %v25 = vld [vmem:[%s0 + $0x4] sm:$0xf]
  %v26 = vld [vmem:[%s1] sm:$0xf]
  %v27 = vld [vmem:[%s1 + $0x4] sm:$0xf]
  %v28 = vld [vmem:[%s1 + $0x8] sm:$0xf]
  %v29 = vld [vmem:[%s1 + $0xc] sm:$0xf]
  %v30 = vld [vmem:[%s1 + $0x10] sm:$0xf]
  %v31 = vld [vmem:[%s1 + $0x14] sm:$0xf]
  %v32 = vld [vmem:[%s1 + $0x18] sm:$0xf]
  %v33 = vld [vmem:[%s1 + $0x1c] sm:$0xf]
  %v34 = vld [vmem:[%s2] sm:$0x1]
  %v36 = vperm.slane %v34, 0
  %v40 = vunpack.c.l.b16 %v24
  %v41 = vunpack.c.l.b16 %v25
  %v42 = vpack.c.b16 %v41, %v40
  %v51 = vunpack.c.l.b16 %v26
  %v52 = vunpack.c.l.b16 %v27
  %v53 = vunpack.c.l.b16 %v28
  %v54 = vunpack.c.l.b16 %v29
  %v55 = vunpack.c.l.b16 %v30
  %v56 = vunpack.c.l.b16 %v31
  %v57 = vunpack.c.l.b16 %v32
  %v58 = vunpack.c.l.b16 %v33
  %v59 = vpack.c.b16 %v52, %v51
  %v60 = vpack.c.b16 %v54, %v53
  %v61 = vpack.c.b16 %v56, %v55
  %v62 = vpack.c.b16 %v58, %v57
  %vm67 = vcmask 523264
  %v69 = vsel %vm67, %v42, 0
  %71 = vmatpush.bf16.msra.mxu0 0
  %72 = vmatpush.bf16.msra.mxu0 0
  %73 = vmatpush.bf16.msra.mxu0 0
  %74 = vmatpush.bf16.msra.mxu0 0
  %75 = vmatpush.bf16.msra.mxu0 %v62
  %76 = vmatpush.bf16.msra.mxu0 %v61
  %77 = vmatpush.bf16.msra.mxu0 %v60
  %78 = vmatpush.bf16.msra.mxu0 %v59
  %79 = vmatmul.bf16.gmra.mxu0 %v69
  %v80 = vpop.f32.mrf.mxu0
  %v81 = vadd.f32 %v36, %v80
  %v82 = vpop.f32.mrf.mxu0
  %v83 = vadd.f32 %v36, %v82
  %84 = vdwg.mxu0
  %v85 = vld [vmem:[%s3] sm:$0xf]
  %v86 = vld [vmem:[%s3 + $0x4] sm:$0xf]
  %v87 = vunpack.c.l.bf16 %v85
  %v88 = vunpack.c.l.bf16 %v86
  %v89 = vadd.f32 %v81, %v87
  %v90 = vadd.f32 %v83, %v88
  %vm91 = vcmask 261120
  %v92 = vsel %vm91, %v89, 0.0
  %93 = vadd.xlane.f32.xlu0 %v92
  %v94 = vpop.xlane.xlu0 %93
  %v95 = vsel %vm91, %v90, 0.0
  %96 = vadd.xlane.f32.xlu0 %v95
  %v97 = vpop.xlane.xlu0 %96
  %v98 = vrcp.pop 32.0
  %v99 = vmul.f32 32.0, %v98
  %v100 = vsub.f32 1.0, %v99
  %v101 = vmul.f32 %v98, %v100
  %v102 = vadd.f32 %v98, %v101
  %vm103 = vweird.f32 %v98
  %v104 = vsel %vm103, %v98, %v102
  %v105 = vmul.f32 %v94, %v104
  %v106 = vmul.f32 %v97, %v104
  %v107 = vsub.f32 %v89, %v105
  %v108 = vsub.f32 %v90, %v106
  %v109 = vmul.f32 %v107, %v107
  %v110 = vmul.f32 %v108, %v108
  %v111 = vsel %vm91, %v109, 0.0
  %112 = vadd.xlane.f32.xlu0 %v111
  %v113 = vpop.xlane.xlu0 %112
  %v114 = vsel %vm91, %v110, 0.0
  %115 = vadd.xlane.f32.xlu0 %v114
  %v116 = vpop.xlane.xlu0 %115
  %v117 = vmul.f32 %v113, %v104
  %v118 = vmul.f32 %v116, %v104
  %v119 = vadd.f32 %v117, 1e-12
  %v120 = vadd.f32 %v118, 1e-12
  %v121 = vrsqrt.pop %v119
  %v122 = vmul.f32 %v121, %v119
  %v123 = vmul.f32 %v122, %v121
  %v124 = vmul.f32 0.5, %v123
  %v125 = vsub.f32 1.5, %v124
  %v126 = vmul.f32 %v121, %v125
  %vm127 = vweird.f32 %v119
  %vm128 = vweird.f32 %v121
  %vm129 = vmor %vm127, %vm128
  %v130 = vsel %vm129, %v121, %v126
  %v131 = vrsqrt.pop %v120
  %v132 = vmul.f32 %v131, %v120
  %v133 = vmul.f32 %v132, %v131
  %v134 = vmul.f32 0.5, %v133
  %v135 = vsub.f32 1.5, %v134
  %v136 = vmul.f32 %v131, %v135
  %vm137 = vweird.f32 %v120
  %vm138 = vweird.f32 %v131
  %vm139 = vmor %vm137, %vm138
  %v140 = vsel %vm139, %v131, %v136
  %v141 = vmul.f32 %v107, %v130
  %v142 = vmul.f32 %v108, %v140
  %v143 = vld [vmem:[%s4] sm:$0x1]
  %v145 = vperm.slane %v143, 0
  %v147 = vmul.f32 %v141, %v145
  %v148 = vmul.f32 %v142, %v145
  %v149 = vld [vmem:[%s5] sm:$0x1]
  %v151 = vperm.slane %v149, 0
  %v153 = vadd.f32 %v147, %v151
  %v154 = vadd.f32 %v148, %v151
  %v155 = vpack.c.bf16 %v153, %v153
  %v156 = vpack.c.bf16 %v154, %v154
  %vm157 = vcmask 257024
  %158 = vst.msk [vmem:[%s6] sm:$0xf] %vm157, %v155
  %159 = vst.msk [vmem:[%s6 + $0x4] sm:$0xf] %vm157, %v156
  // Predicated region
  $region26: #{emotion_classifier_forward.17} parent=0 // pred_check
    _
  $region27: #{emotion_classifier_forward.17} parent=0 // pred_check_branch
    %161 = sbr.rel (0) target = $region29
  $region28: #{emotion_classifier_forward.17} parent=0 // pred_region
    _
  $region29: #{emotion_classifier_forward.17} parent=0 // pred_fallthru
    _
  // Predicated region
  $region30: #{emotion_classifier_forward.17} parent=0 // pred_check
    _
  $region31: #{emotion_classifier_forward.17} parent=0 // pred_check_branch
    %163 = sbr.rel (0) target = $region33
  $region32: #{emotion_classifier_forward.17} parent=0 // pred_region
    _
  $region33: #{emotion_classifier_forward.17} parent=0 // pred_fallthru
    _

</llo_original>
